<compile_context>
chip_gen: v7x
topology: tpu7x:2x2x1
jax: 0.10.0
libtpu: 0.0.40
codegen_flags: <defaults>
</compile_context>

<pallas_src>
import functools

import jax
import jax.numpy as jnp
import numpy as np
from jax.experimental import pallas as pl
from jax.experimental.pallas import tpu as pltpu

K = 7            # conv kernel size
P = K // 2       # spatial padding (3)
KK = K * K       # taps per input channel (49)


# ----------------------------------------------------------------------------
# Host-side constant tables
# ----------------------------------------------------------------------------
def _make_toeplitz_weight(w, H, W, HWp):
    """(2, HWp, HWp) f32 masked banded-Toeplitz conv weight.

    T[c, src, dst] = conv weight of input-channel c (0=avg, 1=max) for the
    7x7 "SAME" tap that reads flat source `src` for flat output `dst`; zero
    for out-of-bounds taps and for pad lanes (>= H*W).
    """
    HW = H * W
    wk = np.asarray(w, np.float32).reshape(2, K, K)
    T = np.zeros((2, HWp, HWp), np.float32)
    out = np.arange(HW)
    oh, ow = out // W, out % W
    for dy in range(K):
        for dx in range(K):
            sh = oh + dy - P
            sw = ow + dx - P
            valid = (sh >= 0) & (sh < H) & (sw >= 0) & (sw < W)
            src = (sh * W + sw)[valid]
            dst = out[valid]
            T[0, src, dst] = wk[0, dy, dx]
            T[1, src, dst] = wk[1, dy, dx]
    return T


def _make_weighted_masks(w, H, W, HWp):
    """(2*KK, HWp) f32: conv weights folded into per-tap edge-validity masks.

    Rows [0,KK) weight the avg map, rows [KK,2KK) the max map; pad lanes
    (>= H*W) are zero. Used by the roll-based fallback epilogue.
    """
    HW = H * W
    wk = np.asarray(w, np.float32).reshape(2, K, K)
    out = np.zeros((2 * KK, HWp), np.float32)
    pos = np.arange(HW)
    hh, ww = pos // W, pos % W
    for dy in range(K):
        for dx in range(K):
            t = dy * K + dx
            sh, sw = hh + dy - P, ww + dx - P
            valid = ((sh >= 0) & (sh < H) & (sw >= 0) & (sw < W)).astype(np.float32)
            out[t, :HW] = wk[0, dy, dx] * valid
            out[KK + t, :HW] = wk[1, dy, dx] * valid
    return out


# ----------------------------------------------------------------------------
# Generation-aware sizing
# ----------------------------------------------------------------------------
def _chip_info():
    """(vmem_capacity_bytes, multi_tensorcore) with conservative fallbacks."""
    vmem_cap = 128 << 20
    try:
        vmem_cap = int(pltpu.get_tpu_info().vmem_capacity_bytes)
    except Exception:
        pass
    # v7x (64 MiB VMEM/TC) has 2 TensorCores sharing 'parallel' grid axes;
    # v5e/v6e (128 MiB) have a single TensorCore.
    multi_core = vmem_cap <= (96 << 20)
    return vmem_cap, multi_core


def _largest_divisor_leq(n, cap, multiple_of=1):
    """Largest divisor of n that is <= cap, preferring multiples of `multiple_of`."""
    cap = max(1, min(n, cap))
    best = None
    for d in range(cap, 0, -1):
        if n % d == 0:
            if best is None:
                best = d
            if d % multiple_of == 0:
                return d
    return best if best is not None else 1


def _pick_tiles(N, C, HWp, itemsize, block_budget_bytes, force_split):
    """Pick (TN, TC) so one x block is ~block_budget_bytes (native dtype)."""
    elems_budget = max(1, block_budget_bytes // itemsize)
    # Sublane tile: 8 for 4-byte, 16 for 2-byte, 32 for 1-byte dtypes.
    sub = max(8, 32 // itemsize)

    tn_cap = max(1, elems_budget // max(C * HWp, 1))
    if force_split and N >= 2:
        # Multi-TensorCore chip: keep >=2 steps on the parallel axis so both
        # cores get work.
        tn_cap = max(1, min(tn_cap, N // 2))
    # Prefer TN a multiple of 8 so the (TN, HWp) accumulators fill vregs.
    tn = _largest_divisor_leq(N, tn_cap, multiple_of=8)

    tc_cap = max(1, elems_budget // max(tn * HWp, 1))
    tc = _largest_divisor_leq(C, tc_cap, multiple_of=sub)
    if tc != C and tc % sub != 0:
        # (sub, 128) tiling rule: TC must be a multiple of `sub` unless == C.
        cands = [d for d in range(sub, C, sub) if C % d == 0]
        tc = min(cands) if cands else C
    return tn, tc


# ----------------------------------------------------------------------------
# Kernels
# ----------------------------------------------------------------------------
def _sa_kernel_mxu(tw_ref, x_ref, o_ref, sum_sc, max_sc, *, inv_c):
    # tw_ref: (2, HWp, HWp) VMEM f32  masked banded-Toeplitz conv weight
    # x_ref:  (TN, TC, HWp) VMEM      input block, native dtype
    # o_ref:  (TN, 1, HWp)  VMEM      output block, input dtype
    # sum_sc/max_sc: (TN, HWp) f32    running channel sum / max
    ci = pl.program_id(1)
    nc = pl.num_programs(1)

    @pl.when(ci == 0)
    def _init():
        sum_sc[...] = jnp.zeros_like(sum_sc)
        max_sc[...] = jnp.full_like(max_sc, -jnp.inf)

    # Fused single-pass channel reduction; upcast in-register only.
    xb = x_ref[...].astype(jnp.float32)                 # (TN, TC, HWp)
    sum_sc[...] += jnp.sum(xb, axis=1)
    max_sc[...] = jnp.maximum(max_sc[...], jnp.max(xb, axis=1))

    @pl.when(ci == nc - 1)
    def _finalize():
        avg = sum_sc[...] * inv_c                       # mean = sum * (1/C)
        # Whole 7x7 "SAME" conv as two matmuls on the otherwise-idle MXU.
        conv = jnp.dot(avg, tw_ref[0],
                       preferred_element_type=jnp.float32,
                       precision=jax.lax.Precision.HIGHEST)
        conv = conv + jnp.dot(max_sc[...], tw_ref[1],
                              preferred_element_type=jnp.float32,
                              precision=jax.lax.Precision.HIGHEST)
        o_ref[:, 0, :] = jax.nn.sigmoid(conv).astype(o_ref.dtype)


def _sa_kernel_roll(wm_ref, x_ref, o_ref, sum_sc, max_sc, *, inv_c, W, HWp):
    # wm_ref: (2*KK, HWp) VMEM f32  weights pre-folded into per-tap masks
    # (fallback epilogue for large H*W where the Toeplitz weight won't fit).
    ci = pl.program_id(1)
    nc = pl.num_programs(1)

    @pl.when(ci == 0)
    def _init():
        sum_sc[...] = jnp.zeros_like(sum_sc)
        max_sc[...] = jnp.full_like(max_sc, -jnp.inf)

    xb = x_ref[...].astype(jnp.float32)
    sum_sc[...] += jnp.sum(xb, axis=1)
    max_sc[...] = jnp.maximum(max_sc[...], jnp.max(xb, axis=1))

    @pl.when(ci == nc - 1)
    def _finalize():
        avg = sum_sc[...] * inv_c
        mx = max_sc[...]
        acc = jnp.zeros_like(avg)
        # 7x7 conv via XLU lane rolls on the flattened (padded) maps; the
        # pre-weighted masks zero out-of-bounds / wrapped / pad-lane reads.
        for dy in range(K):
            for dx in range(K):
                t = dy * K + dx
                delta = (dy - P) * W + (dx - P)         # flat source offset
                s = (-delta) % HWp
                ra = pltpu.roll(avg, s, axis=1) if s else avg
                rm = pltpu.roll(mx, s, axis=1) if s else mx
                acc = acc + wm_ref[t] * ra + wm_ref[KK + t] * rm
        # TODO(synk): halve the roll count by stacking avg/mx along sublanes
        # when TN is a multiple of 8, and tile the lane axis (with a 3*W halo)
        # for very large H*W to bound vreg pressure.
        o_ref[:, 0, :] = jax.nn.sigmoid(acc).astype(o_ref.dtype)


# ----------------------------------------------------------------------------
# Wrapper
# ----------------------------------------------------------------------------
def spatial_attention(x, w):
    """x: (N, C, H, W); w: (1, 2, K, K) conv weight (PyTorch OIHW, no bias)."""
    N, C, H, W = x.shape
    HW = H * W
    HWp = ((HW + 127) // 128) * 128                     # lane-dense padding
    out_dtype = x.dtype
    itemsize = np.dtype(x.dtype).itemsize
    out_itemsize = np.dtype(out_dtype).itemsize

    xf = x.reshape(N, C, HW)                            # keep native dtype
    if HWp != HW:
        xf = jnp.pad(xf, ((0, 0), (0, 0), (0, HWp - HW)))

    # Epilogue selection: resident Toeplitz MXU matmul for moderate HW,
    # roll+folded-mask fallback otherwise.
    use_mxu = (2 * HWp * HWp * 4) <= (8 << 20)
    if use_mxu:
        table = jnp.asarray(_make_toeplitz_weight(w, H, W, HWp))   # (2,HWp,HWp)
        table_spec = pl.BlockSpec((2, HWp, HWp), lambda n, ci: (0, 0, 0))
        kernel = functools.partial(_sa_kernel_mxu, inv_c=1.0 / C)
    else:
        table = jnp.asarray(_make_weighted_masks(w, H, W, HWp))    # (2KK,HWp)
        table_spec = pl.BlockSpec((2 * KK, HWp), lambda n, ci: (0, 0))
        kernel = functools.partial(_sa_kernel_roll, inv_c=1.0 / C, W=W, HWp=HWp)
    table_bytes = int(table.size) * 4

    # Generation-aware VMEM request and per-step block budget.
    vmem_cap, multi_core = _chip_info()
    cap_request = min((vmem_cap * 5) // 8, 96 << 20)    # ~40 MiB v7x, ~80 MiB v5e/v6e
    block_budget = max(1 << 20,
                       min(12 << 20,
                           (cap_request - 2 * table_bytes - (2 << 20)) // 4))

    TN, TC = _pick_tiles(N, C, HWp, itemsize, block_budget, multi_core)
    grid = (N // TN, C // TC)

    x_block_bytes = TN * TC * HWp * itemsize
    out_block_bytes = TN * HWp * out_itemsize
    scratch_bytes = 2 * max(TN, 8) * HWp * 4
    need = (2 * x_block_bytes + 2 * table_bytes + 2 * out_block_bytes
            + scratch_bytes + (2 << 20))
    vmem_limit = int(min(cap_request, max(need, 16 << 20)))

    conv_flops = N * 2 * (2 * HWp) * HWp if use_mxu else N * 4 * KK * HWp
    cost = pl.CostEstimate(
        flops=int(2 * N * C * HWp + conv_flops),
        transcendentals=int(N * HWp),
        bytes_accessed=int(N * C * HWp * itemsize + N * HWp * out_itemsize
                           + table_bytes),
    )

    out = pl.pallas_call(
        kernel,
        out_shape=jax.ShapeDtypeStruct((N, 1, HWp), out_dtype),
        grid_spec=pltpu.PrefetchScalarGridSpec(
            num_scalar_prefetch=0,
            grid=grid,
            in_specs=[
                table_spec,                                           # conv table
                pl.BlockSpec((TN, TC, HWp), lambda n, ci: (n, ci, 0)),  # x
            ],
            out_specs=pl.BlockSpec((TN, 1, HWp), lambda n, ci: (n, 0, 0)),
            scratch_shapes=[
                pltpu.VMEM((TN, HWp), jnp.float32),   # running channel sum
                pltpu.VMEM((TN, HWp), jnp.float32),   # running channel max
            ],
        ),
        compiler_params=pltpu.CompilerParams(
            dimension_semantics=("parallel", "arbitrary"),
            vmem_limit_bytes=vmem_limit,
        ),
        cost_estimate=cost,
    )(table, xf)

    return out[:, :, :HW].reshape(N, 1, H, W)


# ----------------------------------------------------------------------------
# Reference + test
# ----------------------------------------------------------------------------
def _reference(x, w):
    x = x.astype(jnp.float32)
    avg = jnp.mean(x, axis=1, keepdims=True)
    mx = jnp.max(x, axis=1, keepdims=True)
    cat = jnp.concatenate([avg, mx], axis=1)
    out = jax.lax.conv_general_dilated(
        cat, jnp.asarray(w, jnp.float32), window_strides=(1, 1), padding="SAME",
        dimension_numbers=("NCHW", "OIHW", "NCHW"))
    return jax.nn.sigmoid(out)


if __name__ == "__main__":
    key = jax.random.PRNGKey(0)
    kx, kw = jax.random.split(key)

    N, C, H, W = 2, 4, 16, 16
    x = jax.random.normal(kx, (N, C, H, W), dtype=jnp.float32)
    # Deterministic synthetic conv weight, shape (out=1, in=2, K, K) like nn.Conv2d.
    w = 0.1 * jax.random.normal(kw, (1, 2, K, K), dtype=jnp.float32)

    out = jax.block_until_ready(spatial_attention(x, w))
    ref = jax.block_until_ready(_reference(x, w))

    # HIGHEST-precision f32 MXU matmul gives ~1e-6 error; tolerance is kept a
    # little looser to stay robust to reduced-precision MXU pass configs.
    np.testing.assert_allclose(np.asarray(out), np.asarray(ref),
                               rtol=2e-3, atol=2e-3)
    print("KERNEL_OK")
</pallas_src>

<mosaic_0001>
module attributes {stable_mosaic.version = 11 : i64} {
  func.func @_sa_kernel_mxu(%arg0: i32, %arg1: i32, %arg2: memref<2x256x256xf32, #tpu.memory_space<vmem>>, %arg3: memref<2x4x256xf32, #tpu.memory_space<vmem>>, %arg4: memref<2x1x256xf32, #tpu.memory_space<vmem>>, %arg5: memref<2x256xf32, #tpu.memory_space<vmem>>, %arg6: memref<2x256xf32, #tpu.memory_space<vmem>>) attributes {dimension_semantics = [#tpu.dimension_semantics<parallel>, #tpu.dimension_semantics<arbitrary>], iteration_bounds = array<i64: 1, 1>, scalar_prefetch = 0 : i64, scratch_operands = 2 : i64, tpu.core_type = #tpu.core_type<tc>, window_params = [{pipeline_mode = #tpu.pipeline_mode<synchronous>, transform_indices = @transform_0, window_bounds = array<i64: 2, 256, 256>}, {transform_indices = @transform_1, window_bounds = array<i64: 2, 4, 256>}, {transform_indices = @transform_2, window_bounds = array<i64: 2, 1, 256>}]} {
    %c0_i32 = arith.constant 0 : i32
    %0 = arith.cmpi eq, %arg1, %c0_i32 : i32
    %1 = arith.extui %0 : i1 to i32
    %c0_i32_0 = arith.constant 0 : i32
    %2 = arith.cmpi ne, %1, %c0_i32_0 : i32
    scf.if %2 {
      %cst_14 = arith.constant 0.000000e+00 : f32
      %15 = vector.broadcast %cst_14 : f32 to vector<2x256xf32>
      %c0_15 = arith.constant 0 : index
      %c0_16 = arith.constant 0 : index
      %16 = vector.load %arg5[%c0_15, %c0_16] : memref<2x256xf32, #tpu.memory_space<vmem>>, vector<2x256xf32>
      tpu.vector_store %arg5[%c0_15, %c0_16], %15 {strides = array<i32>} : memref<2x256xf32, #tpu.memory_space<vmem>>, vector<2x256xf32>,
      %cst_17 = arith.constant 0xFF800000 : f32
      %17 = vector.broadcast %cst_17 : f32 to vector<2x256xf32>
      %c0_18 = arith.constant 0 : index
      %c0_19 = arith.constant 0 : index
      %18 = vector.load %arg6[%c0_18, %c0_19] : memref<2x256xf32, #tpu.memory_space<vmem>>, vector<2x256xf32>
      tpu.vector_store %arg6[%c0_18, %c0_19], %17 {strides = array<i32>} : memref<2x256xf32, #tpu.memory_space<vmem>>, vector<2x256xf32>,
    } else {
    }
    %c0 = arith.constant 0 : index
    %c0_1 = arith.constant 0 : index
    %c0_2 = arith.constant 0 : index
    %3 = vector.load %arg3[%c0, %c0_1, %c0_2] : memref<2x4x256xf32, #tpu.memory_space<vmem>>, vector<2x4x256xf32>
    %c0_3 = arith.constant 0 : index
    %c0_4 = arith.constant 0 : index
    %4 = vector.load %arg5[%c0_3, %c0_4] : memref<2x256xf32, #tpu.memory_space<vmem>>, vector<2x256xf32>
    %cst = arith.constant dense<0.000000e+00> : vector<2x256xf32>
    %5 = vector.multi_reduction <add>, %3, %cst [1] : vector<2x4x256xf32> to vector<2x256xf32>
    %6 = arith.addf %4, %5 : vector<2x256xf32>
    %c0_5 = arith.constant 0 : index
    %c0_6 = arith.constant 0 : index
    %7 = vector.load %arg5[%c0_5, %c0_6] : memref<2x256xf32, #tpu.memory_space<vmem>>, vector<2x256xf32>
    tpu.vector_store %arg5[%c0_5, %c0_6], %6 {strides = array<i32>} : memref<2x256xf32, #tpu.memory_space<vmem>>, vector<2x256xf32>,
    %c0_7 = arith.constant 0 : index
    %c0_8 = arith.constant 0 : index
    %8 = vector.load %arg6[%c0_7, %c0_8] : memref<2x256xf32, #tpu.memory_space<vmem>>, vector<2x256xf32>
    %cst_9 = arith.constant dense<0xFF800000> : vector<2x256xf32>
    %9 = vector.multi_reduction <maximumf>, %3, %cst_9 [1] : vector<2x4x256xf32> to vector<2x256xf32>
    %10 = arith.maximumf %8, %9 : vector<2x256xf32>
    %c0_10 = arith.constant 0 : index
    %c0_11 = arith.constant 0 : index
    %11 = vector.load %arg6[%c0_10, %c0_11] : memref<2x256xf32, #tpu.memory_space<vmem>>, vector<2x256xf32>
    tpu.vector_store %arg6[%c0_10, %c0_11], %10 {strides = array<i32>} : memref<2x256xf32, #tpu.memory_space<vmem>>, vector<2x256xf32>,
    %c0_i32_12 = arith.constant 0 : i32
    %12 = arith.cmpi eq, %arg1, %c0_i32_12 : i32
    %13 = arith.extui %12 : i1 to i32
    %c0_i32_13 = arith.constant 0 : i32
    %14 = arith.cmpi ne, %13, %c0_i32_13 : i32
    scf.if %14 {
      %c0_14 = arith.constant 0 : index
      %c0_15 = arith.constant 0 : index
      %15 = vector.load %arg5[%c0_14, %c0_15] : memref<2x256xf32, #tpu.memory_space<vmem>>, vector<2x256xf32>
      %cst_16 = arith.constant 2.500000e-01 : f32
      %16 = vector.broadcast %cst_16 : f32 to vector<2x256xf32>
      %17 = arith.mulf %15, %16 : vector<2x256xf32>
      %c0_17 = arith.constant 0 : index
      %c0_18 = arith.constant 0 : index
      %c0_19 = arith.constant 0 : index
      %18 = vector.load %arg2[%c0_17, %c0_18, %c0_19] : memref<2x256x256xf32, #tpu.memory_space<vmem>>, vector<1x256x256xf32>
      %19 = vector.shape_cast %18 : vector<1x256x256xf32> to vector<256x256xf32>
      %cst_20 = arith.constant dense<0.000000e+00> : vector<2x256xf32>
      %20 = tpu.matmul %17, %19, %cst_20 {dimension_numbers = #tpu.dot_dimension_numbers<[1], [0], [0], [1], [0, 0, 1, 1], [], []>, precision = #tpu.contract_precision<fp32>} : vector<2x256xf32>, vector<256x256xf32>, vector<2x256xf32> -> vector<2x256xf32>
      %c0_21 = arith.constant 0 : index
      %c0_22 = arith.constant 0 : index
      %21 = vector.load %arg6[%c0_21, %c0_22] : memref<2x256xf32, #tpu.memory_space<vmem>>, vector<2x256xf32>
      %c1 = arith.constant 1 : index
      %c0_23 = arith.constant 0 : index
      %c0_24 = arith.constant 0 : index
      %22 = vector.load %arg2[%c1, %c0_23, %c0_24] : memref<2x256x256xf32, #tpu.memory_space<vmem>>, vector<1x256x256xf32>
      %23 = vector.shape_cast %22 : vector<1x256x256xf32> to vector<256x256xf32>
      %cst_25 = arith.constant dense<0.000000e+00> : vector<2x256xf32>
      %24 = tpu.matmul %21, %23, %cst_25 {dimension_numbers = #tpu.dot_dimension_numbers<[1], [0], [0], [1], [0, 0, 1, 1], [], []>, precision = #tpu.contract_precision<fp32>} : vector<2x256xf32>, vector<256x256xf32>, vector<2x256xf32> -> vector<2x256xf32>
      %25 = arith.addf %20, %24 : vector<2x256xf32>
      %26 = arith.negf %25 : vector<2x256xf32>
      %27 = math.exp %26 : vector<2x256xf32>
      %cst_26 = arith.constant 1.000000e+00 : f32
      %28 = vector.broadcast %cst_26 : f32 to vector<2x256xf32>
      %29 = arith.addf %28, %27 : vector<2x256xf32>
      %30 = arith.divf %28, %29 : vector<2x256xf32>
      %c0_27 = arith.constant 0 : index
      %c0_28 = arith.constant 0 : index
      %c0_29 = arith.constant 0 : index
      %31 = vector.load %arg4[%c0_27, %c0_28, %c0_29] : memref<2x1x256xf32, #tpu.memory_space<vmem>>, vector<2x1x256xf32>
      %32 = vector.shape_cast %31 : vector<2x1x256xf32> to vector<2x256xf32>
      %33 = vector.shape_cast %30 : vector<2x256xf32> to vector<2x1x256xf32>
      tpu.vector_store %arg4[%c0_27, %c0_28, %c0_29], %33 {strides = array<i32>} : memref<2x1x256xf32, #tpu.memory_space<vmem>>, vector<2x1x256xf32>,
    } else {
    }
    return
  }
  func.func @transform_0(%arg0: i32, %arg1: i32) -> (i32, i32, i32) {
    %c0_i32 = arith.constant 0 : i32
    %c0_i32_0 = arith.constant 0 : i32
    %c0_i32_1 = arith.constant 0 : i32
    %c0_i32_2 = arith.constant 0 : i32
    return %c0_i32, %c0_i32_0, %c0_i32_1 : i32, i32, i32
  }
  func.func @transform_1(%arg0: i32, %arg1: i32) -> (i32, i32, i32) {
    %c0_i32 = arith.constant 0 : i32
    %c0_i32_0 = arith.constant 0 : i32
    return %arg0, %arg1, %c0_i32 : i32, i32, i32
  }
  func.func @transform_2(%arg0: i32, %arg1: i32) -> (i32, i32, i32) {
    %c0_i32 = arith.constant 0 : i32
    %c0_i32_0 = arith.constant 0 : i32
    %c0_i32_1 = arith.constant 0 : i32
    return %arg0, %c0_i32, %c0_i32_0 : i32, i32, i32
  }
}

</mosaic_0001>

<llo_original>
// kernel: tpu_custom_call.1
$region0: #{tpu_custom_call.1}
  #allocation0 [shape = 'u32[]', space=smem, size = 0x4, offset = 0x4, fixed_abs, tag = 'smem constant byte address 0x4 - core index']
  #allocation1 [shape = 'u32[144,128]{1,0:T(1,128)}', space=vmem, size = 0x12000, scoped, tag = 'internal scratch']
  #allocation2 [shape = 'f32[2,256]{1,0:T(2,128)}', space=vmem, size = 0x800, scoped, tag = 'scratch operand']
  #allocation3 [shape = 'f32[2,256]{1,0:T(2,128)}', space=vmem, size = 0x800, scoped, tag = 'scratch operand']
  %s0 = inlined_call_operand.hbm [shape: f32[2,256,256], index: 0, kind: input, shape index: {}]
  %s1 = inlined_call_operand.hbm [shape: f32[2,4,256], index: 1, kind: input, shape index: {}]
  %s2 = inlined_call_operand.hbm [shape: f32[2,1,256], index: 2, kind: output, shape index: {}]
  %s3 = sld [smem:[#allocation0]]
  $region34: #{tpu_custom_call.1} parent=0
    _
  %s5 = ssub.s32 1, %s3
  %s6 = scalar_select 0, %s5, %s3
  $region1: #{tpu_custom_call.1} parent=0
    #allocation4 [shape = 'u8[524288]{0}', space=vmem, size = 0x80000, scoped, tag = 'input window, operand 0, single buffered']
    #allocation5 [shape = 's32[1]{0}', space=sflag, size = 0x4, scoped, tag = 'scoped memory for tpu_custom_call.1']
    #allocation6 [shape = 's32[1]{0}', space=sflag, size = 0x4, scoped, tag = 'scoped memory for tpu_custom_call.1']
    #allocation7 [shape = 'u8[8192]{0}', space=vmem, size = 0x2000, scoped, tag = 'input window, operand 1, single buffered']
    #allocation8 [shape = 's32[1]{0}', space=sflag, size = 0x4, scoped, tag = 'scoped memory for tpu_custom_call.1']
    #allocation9 [shape = 'u8[2048]{0}', space=vmem, size = 0x800, scoped, tag = 'output window, operand 0, single buffered']
    %7 = vsyncpa [#allocation5], 0
    %8 = vsyncpa [#allocation8], 0
    %9 = vsyncpa [#allocation6], 0
    // Predicated region
    $region2: #{tpu_custom_call.1} parent=1 // pred_check
      _
    $region3: #{tpu_custom_call.1} parent=1 // pred_check_branch
      %11 = sbr.rel (0) target = $region5
    $region4: #{tpu_custom_call.1} parent=1 // pred_region
      %s13 = ssub.s32 16384, 16384
      %14 = vsyncadd [#allocation5], %s13
      %s15 = sshll.u32 [#allocation4], 4
      %s16 = int_to_ptr.vmem [resolvable:$true] %s15
      %21 = dma.hbm_to_vmem [thread:$0]  %s0, 16384, %s16, [#allocation5], 256, 256, 16
    $region5: #{tpu_custom_call.1} parent=1 // pred_fallthru
      _
    // Predicated region
    $region6: #{tpu_custom_call.1} parent=1 // pred_check
      _
    $region7: #{tpu_custom_call.1} parent=1 // pred_check_branch
      %23 = sbr.rel (0) target = $region9
    $region8: #{tpu_custom_call.1} parent=1 // pred_region
      %s25 = ssub.s32 256, 256
      %26 = vsyncadd [#allocation8], %s25
      %s27 = sshll.u32 [#allocation7], 4
      %s28 = int_to_ptr.vmem [resolvable:$true] %s27
      %33 = dma.hbm_to_vmem [thread:$0]  %s1, 256, %s28, [#allocation8], 128, 128, 8
    $region9: #{tpu_custom_call.1} parent=1 // pred_fallthru
      _
    // Predicated region
    $region10: #{tpu_custom_call.1} parent=1 // pred_check
      _
    $region11: #{tpu_custom_call.1} parent=1 // pred_check_branch
      %35 = sbr.rel (0) target = $region13
    $region12: #{tpu_custom_call.1} parent=1 // pred_region
      %36 = dma.done [#allocation5], 16384
    $region13: #{tpu_custom_call.1} parent=1 // pred_fallthru
      _
    // Predicated region
    $region14: #{tpu_custom_call.1} parent=1 // pred_check
      _
    $region15: #{tpu_custom_call.1} parent=1 // pred_check_branch
      %38 = sbr.rel (0) target = $region17
    $region16: #{tpu_custom_call.1} parent=1 // pred_region
      %39 = dma.done [#allocation8], 256
    $region17: #{tpu_custom_call.1} parent=1 // pred_fallthru
      _
    %p40 = scmp.eq.s32.totalorder 0, 0
    // Predicated region
    $region18: #{tpu_custom_call.1} parent=1 // pred_check
      %p41 = pneg %p40
    $region19: #{tpu_custom_call.1} parent=1 // pred_check_branch
      %43 = sbr.rel (%p41) target = $region21
    $region20: #{tpu_custom_call.1} parent=1 // pred_region
      %44 = vst [vmem:[#allocation2] sm:$0xf] 0.0
      %45 = vst [vmem:[#allocation3] sm:$0xf] -inf
    $region21: #{tpu_custom_call.1} parent=1 // pred_fallthru
      _
    %v46 = vld [vmem:[#allocation7] sm:$0xff]
    %v47 = vld [vmem:[#allocation7 + $0x8] sm:$0xff]
    %v48 = vld [vmem:[#allocation2] sm:$0xf]
    %v51 = vcombine.high %v46, %v46
    %v52 = vcombine.high %v47, %v47
    %vm55 = vcmask 1043456
    %v56 = vsel %vm55, %v46, 0.0
    %v57 = vrot.slane %v56, 4
    %v58 = vadd.f32 %v56, %v57
    %v59 = vrot.slane %v58, 2
    %v60 = vadd.f32 %v58, %v59
    %v61 = vrot.slane %v60, 1
    %v62 = vadd.f32 %v60, %v61
    %v63 = vsel %vm55, %v51, 0.0
    %v64 = vrot.slane %v63, 4
    %v65 = vadd.f32 %v63, %v64
    %v66 = vrot.slane %v65, 2
    %v67 = vadd.f32 %v65, %v66
    %v68 = vrot.slane %v67, 1
    %v69 = vadd.f32 %v67, %v68
    %v70 = vsel %vm55, %v47, 0.0
    %v71 = vrot.slane %v70, 4
    %v72 = vadd.f32 %v70, %v71
    %v73 = vrot.slane %v72, 2
    %v74 = vadd.f32 %v72, %v73
    %v75 = vrot.slane %v74, 1
    %v76 = vadd.f32 %v74, %v75
    %v77 = vsel %vm55, %v52, 0.0
    %v78 = vrot.slane %v77, 4
    %v79 = vadd.f32 %v77, %v78
    %v80 = vrot.slane %v79, 2
    %v81 = vadd.f32 %v79, %v80
    %v82 = vrot.slane %v81, 1
    %v83 = vadd.f32 %v81, %v82
    %v88 = vcombine.low %v62, %v69
    %v90 = vunpack.c.l.s4 1983009808
    %v91 = vunpack.c.0.s8 %v90
    %v92 = vlaneseq
    %v93 = vshrl.u32 %v92, 7
    %v94 = vsub.s32 %v91, %v93
    %v95 = vrot.slane %v88, %v94
    %v96 = vcombine.low %v76, %v83
    %v98 = vunpack.c.l.s4 1983009808
    %v99 = vunpack.c.0.s8 %v98
    %v100 = vlaneseq
    %v101 = vshrl.u32 %v100, 7
    %v102 = vsub.s32 %v99, %v101
    %v103 = vrot.slane %v96, %v102
    %vm104 = vcmask 1044484
    %v105 = vsel %vm104, %v95, %v95
    %vm106 = vcmask 1046534
    %v107 = vsel %vm106, %v95, %v105
    %v108 = vrot.slane %v103, 7
    %vm109 = vcmask 1041409
    %v110 = vsel %vm109, %v108, %v107
    %vm111 = vcmask 1043459
    %v112 = vsel %vm111, %v108, %v110
    %vm113 = vcmask 1045509
    %v114 = vsel %vm113, %v108, %v112
    %vm115 = vcmask 1047559
    %v116 = vsel %vm115, %v108, %v114
    %v118 = vadd.f32 %v48, %v116
    %119 = vst [vmem:[#allocation2] sm:$0xf] %v118
    %v120 = vld [vmem:[#allocation3] sm:$0xf]
    %v121 = vsel %vm55, %v46, -inf
    %v122 = vrot.slane %v121, 4
    %v123 = vmax.f32 %v121, %v122
    %v124 = vrot.slane %v123, 2
    %v125 = vmax.f32 %v123, %v124
    %v126 = vrot.slane %v125, 1
    %v127 = vmax.f32 %v125, %v126
    %v128 = vsel %vm55, %v51, -inf
    %v129 = vrot.slane %v128, 4
    %v130 = vmax.f32 %v128, %v129
    %v131 = vrot.slane %v130, 2
    %v132 = vmax.f32 %v130, %v131
    %v133 = vrot.slane %v132, 1
    %v134 = vmax.f32 %v132, %v133
    %v135 = vsel %vm55, %v47, -inf
    %v136 = vrot.slane %v135, 4
    %v137 = vmax.f32 %v135, %v136
    %v138 = vrot.slane %v137, 2
    %v139 = vmax.f32 %v137, %v138
    %v140 = vrot.slane %v139, 1
    %v141 = vmax.f32 %v139, %v140
    %v142 = vsel %vm55, %v52, -inf
    %v143 = vrot.slane %v142, 4
    %v144 = vmax.f32 %v142, %v143
    %v145 = vrot.slane %v144, 2
    %v146 = vmax.f32 %v144, %v145
    %v147 = vrot.slane %v146, 1
    %v148 = vmax.f32 %v146, %v147
    %v153 = vcombine.low %v127, %v134
    %v155 = vunpack.c.l.s4 1983009808
    %v156 = vunpack.c.0.s8 %v155
    %v157 = vlaneseq
    %v158 = vshrl.u32 %v157, 7
    %v159 = vsub.s32 %v156, %v158
    %v160 = vrot.slane %v153, %v159
    %v161 = vcombine.low %v141, %v148
    %v163 = vunpack.c.l.s4 1983009808
    %v164 = vunpack.c.0.s8 %v163
    %v165 = vlaneseq
    %v166 = vshrl.u32 %v165, 7
    %v167 = vsub.s32 %v164, %v166
    %v168 = vrot.slane %v161, %v167
    %v169 = vsel %vm104, %v160, %v160
    %v170 = vsel %vm106, %v160, %v169
    %v171 = vrot.slane %v168, 7
    %v172 = vsel %vm109, %v171, %v170
    %v173 = vsel %vm111, %v171, %v172
    %v174 = vsel %vm113, %v171, %v173
    %v175 = vsel %vm115, %v171, %v174
    %v177 = vmax.f32 %v120, %v175
    %178 = vst [vmem:[#allocation3] sm:$0xf] %v177
    // Predicated region
    $region22: #{tpu_custom_call.1} parent=1 // pred_check
      %p179 = pneg %p40
    $region23: #{tpu_custom_call.1} parent=1 // pred_check_branch
      %181 = sbr.rel (%p179) target = $region25
    $region24: #{tpu_custom_call.1} parent=1 // pred_region
      %v182 = vld [vmem:[#allocation2] sm:$0xf]
      %v183 = vmul.f32 %v182, 0.25
      %v184 = vld [vmem:[#allocation4] sm:$0xff]
      %v185 = vld [vmem:[#allocation4 + $0x8] sm:$0xff]
      %v186 = vld [vmem:[#allocation4 + $0x10] sm:$0xff]
      %v187 = vld [vmem:[#allocation4 + $0x18] sm:$0xff]
      %v188 = vld [vmem:[#allocation4 + $0x20] sm:$0xff]
      %v189 = vld [vmem:[#allocation4 + $0x28] sm:$0xff]
      %v190 = vld [vmem:[#allocation4 + $0x30] sm:$0xff]
      %v191 = vld [vmem:[#allocation4 + $0x38] sm:$0xff]
      %v192 = vld [vmem:[#allocation4 + $0x40] sm:$0xff]
      %v193 = vld [vmem:[#allocation4 + $0x48] sm:$0xff]
      %v194 = vld [vmem:[#allocation4 + $0x50] sm:$0xff]
      %v195 = vld [vmem:[#allocation4 + $0x58] sm:$0xff]
      %v196 = vld [vmem:[#allocation4 + $0x60] sm:$0xff]
      %v197 = vld [vmem:[#allocation4 + $0x68] sm:$0xff]
      %v198 = vld [vmem:[#allocation4 + $0x70] sm:$0xff]
      %v199 = vld [vmem:[#allocation4 + $0x78] sm:$0xff]
      %v200 = vld [vmem:[#allocation4 + $0x80] sm:$0xff]
      %v201 = vld [vmem:[#allocation4 + $0x88] sm:$0xff]
      %v202 = vld [vmem:[#allocation4 + $0x90] sm:$0xff]
      %v203 = vld [vmem:[#allocation4 + $0x98] sm:$0xff]
      %v204 = vld [vmem:[#allocation4 + $0xa0] sm:$0xff]
      %v205 = vld [vmem:[#allocation4 + $0xa8] sm:$0xff]
      %v206 = vld [vmem:[#allocation4 + $0xb0] sm:$0xff]
      %v207 = vld [vmem:[#allocation4 + $0xb8] sm:$0xff]
      %v208 = vld [vmem:[#allocation4 + $0xc0] sm:$0xff]
      %v209 = vld [vmem:[#allocation4 + $0xc8] sm:$0xff]
      %v210 = vld [vmem:[#allocation4 + $0xd0] sm:$0xff]
      %v211 = vld [vmem:[#allocation4 + $0xd8] sm:$0xff]
      %v212 = vld [vmem:[#allocation4 + $0xe0] sm:$0xff]
      %v213 = vld [vmem:[#allocation4 + $0xe8] sm:$0xff]
      %v214 = vld [vmem:[#allocation4 + $0xf0] sm:$0xff]
      %v215 = vld [vmem:[#allocation4 + $0xf8] sm:$0xff]
      %v216 = vld [vmem:[#allocation4 + $0x100] sm:$0xff]
      %v217 = vld [vmem:[#allocation4 + $0x108] sm:$0xff]
      %v218 = vld [vmem:[#allocation4 + $0x110] sm:$0xff]
      %v219 = vld [vmem:[#allocation4 + $0x118] sm:$0xff]
      %v220 = vld [vmem:[#allocation4 + $0x120] sm:$0xff]
      %v221 = vld [vmem:[#allocation4 + $0x128] sm:$0xff]
      %v222 = vld [vmem:[#allocation4 + $0x130] sm:$0xff]
      %v223 = vld [vmem:[#allocation4 + $0x138] sm:$0xff]
      %v224 = vld [vmem:[#allocation4 + $0x140] sm:$0xff]
      %v225 = vld [vmem:[#allocation4 + $0x148] sm:$0xff]
      %v226 = vld [vmem:[#allocation4 + $0x150] sm:$0xff]
      %v227 = vld [vmem:[#allocation4 + $0x158] sm:$0xff]
      %v228 = vld [vmem:[#allocation4 + $0x160] sm:$0xff]
      %v229 = vld [vmem:[#allocation4 + $0x168] sm:$0xff]
      %v230 = vld [vmem:[#allocation4 + $0x170] sm:$0xff]
      %v231 = vld [vmem:[#allocation4 + $0x178] sm:$0xff]
      %v232 = vld [vmem:[#allocation4 + $0x180] sm:$0xff]
      %v233 = vld [vmem:[#allocation4 + $0x188] sm:$0xff]
      %v234 = vld [vmem:[#allocation4 + $0x190] sm:$0xff]
      %v235 = vld [vmem:[#allocation4 + $0x198] sm:$0xff]
      %v236 = vld [vmem:[#allocation4 + $0x1a0] sm:$0xff]
      %v237 = vld [vmem:[#allocation4 + $0x1a8] sm:$0xff]
      %v238 = vld [vmem:[#allocation4 + $0x1b0] sm:$0xff]
      %v239 = vld [vmem:[#allocation4 + $0x1b8] sm:$0xff]
      %v240 = vld [vmem:[#allocation4 + $0x1c0] sm:$0xff]
      %v241 = vld [vmem:[#allocation4 + $0x1c8] sm:$0xff]
      %v242 = vld [vmem:[#allocation4 + $0x1d0] sm:$0xff]
      %v243 = vld [vmem:[#allocation4 + $0x1d8] sm:$0xff]
      %v244 = vld [vmem:[#allocation4 + $0x1e0] sm:$0xff]
      %v245 = vld [vmem:[#allocation4 + $0x1e8] sm:$0xff]
      %v246 = vld [vmem:[#allocation4 + $0x1f0] sm:$0xff]
      %v247 = vld [vmem:[#allocation4 + $0x1f8] sm:$0xff]
      %v248 = vld [vmem:[#allocation3] sm:$0xf]
      %s249 = scalar_lea.vmem [#allocation4], 512
      %v250 = vld [vmem:[%s249] sm:$0xff]
      %v251 = vld [vmem:[%s249 + $0x8] sm:$0xff]
      %v252 = vld [vmem:[%s249 + $0x10] sm:$0xff]
      %v253 = vld [vmem:[%s249 + $0x18] sm:$0xff]
      %v254 = vld [vmem:[%s249 + $0x20] sm:$0xff]
      %v255 = vld [vmem:[%s249 + $0x28] sm:$0xff]
      %v256 = vld [vmem:[%s249 + $0x30] sm:$0xff]
      %v257 = vld [vmem:[%s249 + $0x38] sm:$0xff]
      %v258 = vld [vmem:[%s249 + $0x40] sm:$0xff]
      %v259 = vld [vmem:[%s249 + $0x48] sm:$0xff]
      %v260 = vld [vmem:[%s249 + $0x50] sm:$0xff]
      %v261 = vld [vmem:[%s249 + $0x58] sm:$0xff]
      %v262 = vld [vmem:[%s249 + $0x60] sm:$0xff]
      %v263 = vld [vmem:[%s249 + $0x68] sm:$0xff]
      %v264 = vld [vmem:[%s249 + $0x70] sm:$0xff]
      %v265 = vld [vmem:[%s249 + $0x78] sm:$0xff]
      %v266 = vld [vmem:[%s249 + $0x80] sm:$0xff]
      %v267 = vld [vmem:[%s249 + $0x88] sm:$0xff]
      %v268 = vld [vmem:[%s249 + $0x90] sm:$0xff]
      %v269 = vld [vmem:[%s249 + $0x98] sm:$0xff]
      %v270 = vld [vmem:[%s249 + $0xa0] sm:$0xff]
      %v271 = vld [vmem:[%s249 + $0xa8] sm:$0xff]
      %v272 = vld [vmem:[%s249 + $0xb0] sm:$0xff]
      %v273 = vld [vmem:[%s249 + $0xb8] sm:$0xff]
      %v274 = vld [vmem:[%s249 + $0xc0] sm:$0xff]
      %v275 = vld [vmem:[%s249 + $0xc8] sm:$0xff]
      %v276 = vld [vmem:[%s249 + $0xd0] sm:$0xff]
      %v277 = vld [vmem:[%s249 + $0xd8] sm:$0xff]
      %v278 = vld [vmem:[%s249 + $0xe0] sm:$0xff]
      %v279 = vld [vmem:[%s249 + $0xe8] sm:$0xff]
      %v280 = vld [vmem:[%s249 + $0xf0] sm:$0xff]
      %v281 = vld [vmem:[%s249 + $0xf8] sm:$0xff]
      %v282 = vld [vmem:[%s249 + $0x100] sm:$0xff]
      %v283 = vld [vmem:[%s249 + $0x108] sm:$0xff]
      %v284 = vld [vmem:[%s249 + $0x110] sm:$0xff]
      %v285 = vld [vmem:[%s249 + $0x118] sm:$0xff]
      %v286 = vld [vmem:[%s249 + $0x120] sm:$0xff]
      %v287 = vld [vmem:[%s249 + $0x128] sm:$0xff]
      %v288 = vld [vmem:[%s249 + $0x130] sm:$0xff]
      %v289 = vld [vmem:[%s249 + $0x138] sm:$0xff]
      %v290 = vld [vmem:[%s249 + $0x140] sm:$0xff]
      %v291 = vld [vmem:[%s249 + $0x148] sm:$0xff]
      %v292 = vld [vmem:[%s249 + $0x150] sm:$0xff]
      %v293 = vld [vmem:[%s249 + $0x158] sm:$0xff]
      %v294 = vld [vmem:[%s249 + $0x160] sm:$0xff]
      %v295 = vld [vmem:[%s249 + $0x168] sm:$0xff]
      %v296 = vld [vmem:[%s249 + $0x170] sm:$0xff]
      %v297 = vld [vmem:[%s249 + $0x178] sm:$0xff]
      %v298 = vld [vmem:[%s249 + $0x180] sm:$0xff]
      %v299 = vld [vmem:[%s249 + $0x188] sm:$0xff]
      %v300 = vld [vmem:[%s249 + $0x190] sm:$0xff]
      %v301 = vld [vmem:[%s249 + $0x198] sm:$0xff]
      %v302 = vld [vmem:[%s249 + $0x1a0] sm:$0xff]
      %v303 = vld [vmem:[%s249 + $0x1a8] sm:$0xff]
      %v304 = vld [vmem:[%s249 + $0x1b0] sm:$0xff]
      %v305 = vld [vmem:[%s249 + $0x1b8] sm:$0xff]
      %v306 = vld [vmem:[%s249 + $0x1c0] sm:$0xff]
      %v307 = vld [vmem:[%s249 + $0x1c8] sm:$0xff]
      %v308 = vld [vmem:[%s249 + $0x1d0] sm:$0xff]
      %v309 = vld [vmem:[%s249 + $0x1d8] sm:$0xff]
      %v310 = vld [vmem:[%s249 + $0x1e0] sm:$0xff]
      %v311 = vld [vmem:[%s249 + $0x1e8] sm:$0xff]
      %v312 = vld [vmem:[%s249 + $0x1f0] sm:$0xff]
      %v313 = vld [vmem:[%s249 + $0x1f8] sm:$0xff]
      %v316 = vunpack.c.l.s4 1983009808
      %v317 = vunpack.c.0.s8 %v316
      %v318 = vlaneseq
      %v319 = vshrl.u32 %v318, 7
      %v320 = vsub.s32 %v317, %v319
      %v321 = vrot.slane %v248, %v320
      %v322 = vcombine.high %v321, %v321
      %v325 = vand.u32 %v251, 4294901760
      %326 = vmatprep.subr.mxu0 %v325
      %v327 = vand.u32 %v250, 4294901760
      %328 = vmatpush1.msra.mxu0 %v327
      %v329 = vand.u32 %v253, 4294901760
      %330 = vmatprep.subr.mxu0 %v329
      %v331 = vand.u32 %v252, 4294901760
      %332 = vmatpush1.msra.mxu0 %v331
      %v333 = vand.u32 %v255, 4294901760
      %334 = vmatprep.subr.mxu0 %v333
      %v335 = vand.u32 %v254, 4294901760
      %336 = vmatpush1.msra.mxu0 %v335
      %v337 = vand.u32 %v257, 4294901760
      %338 = vmatprep.subr.mxu0 %v337
      %v339 = vand.u32 %v256, 4294901760
      %340 = vmatpush1.msra.mxu0 %v339
      %v341 = vand.u32 %v259, 4294901760
      %342 = vmatprep.subr.mxu0 %v341
      %v343 = vand.u32 %v258, 4294901760
      %344 = vmatpush1.msra.mxu0 %v343
      %v345 = vand.u32 %v261, 4294901760
      %346 = vmatprep.subr.mxu0 %v345
      %v347 = vand.u32 %v260, 4294901760
      %348 = vmatpush1.msra.mxu0 %v347
      %v349 = vand.u32 %v263, 4294901760
      %350 = vmatprep.subr.mxu0 %v349
      %v351 = vand.u32 %v262, 4294901760
      %352 = vmatpush1.msra.mxu0 %v351
      %v353 = vand.u32 %v265, 4294901760
      %354 = vmatprep.subr.mxu0 %v353
      %v355 = vand.u32 %v264, 4294901760
      %356 = vmatpush1.msra.mxu0 %v355
      %v357 = vand.u32 %v267, 4294901760
      %358 = vmatprep.subr.mxu0 %v357
      %v359 = vand.u32 %v266, 4294901760
      %360 = vmatpush1.msra.mxu0 %v359
      %v361 = vand.u32 %v269, 4294901760
      %362 = vmatprep.subr.mxu0 %v361
      %v363 = vand.u32 %v268, 4294901760
      %364 = vmatpush1.msra.mxu0 %v363
      %v365 = vand.u32 %v271, 4294901760
      %366 = vmatprep.subr.mxu0 %v365
      %v367 = vand.u32 %v270, 4294901760
      %368 = vmatpush1.msra.mxu0 %v367
      %v369 = vand.u32 %v273, 4294901760
      %370 = vmatprep.subr.mxu0 %v369
      %v371 = vand.u32 %v272, 4294901760
      %372 = vmatpush1.msra.mxu0 %v371
      %v373 = vand.u32 %v275, 4294901760
      %374 = vmatprep.subr.mxu0 %v373
      %v375 = vand.u32 %v274, 4294901760
      %376 = vmatpush1.msra.mxu0 %v375
      %v377 = vand.u32 %v277, 4294901760
      %378 = vmatprep.subr.mxu0 %v377
      %v379 = vand.u32 %v276, 4294901760
      %380 = vmatpush1.msra.mxu0 %v379
      %v381 = vand.u32 %v279, 4294901760
      %382 = vmatprep.subr.mxu0 %v381
      %v383 = vand.u32 %v278, 4294901760
      %384 = vmatpush1.msra.mxu0 %v383
      %v385 = vand.u32 %v281, 4294901760
      %386 = vmatprep.subr.mxu0 %v385
      %v387 = vand.u32 %v280, 4294901760
      %388 = vmatpush1.msra.mxu0 %v387
      %v389 = vand.u32 %v283, 4294901760
      %390 = vmatprep.subr.mxu0 %v389
      %v391 = vand.u32 %v282, 4294901760
      %392 = vmatpush1.msra.mxu0 %v391
      %v393 = vand.u32 %v285, 4294901760
      %394 = vmatprep.subr.mxu0 %v393
      %v395 = vand.u32 %v284, 4294901760
      %396 = vmatpush1.msra.mxu0 %v395
      %v397 = vand.u32 %v287, 4294901760
      %398 = vmatprep.subr.mxu0 %v397
      %v399 = vand.u32 %v286, 4294901760
      %400 = vmatpush1.msra.mxu0 %v399
      %v401 = vand.u32 %v289, 4294901760
      %402 = vmatprep.subr.mxu0 %v401
      %v403 = vand.u32 %v288, 4294901760
      %404 = vmatpush1.msra.mxu0 %v403
      %v405 = vand.u32 %v291, 4294901760
      %406 = vmatprep.subr.mxu0 %v405
      %v407 = vand.u32 %v290, 4294901760
      %408 = vmatpush1.msra.mxu0 %v407
      %v409 = vand.u32 %v293, 4294901760
      %410 = vmatprep.subr.mxu0 %v409
      %v411 = vand.u32 %v292, 4294901760
      %412 = vmatpush1.msra.mxu0 %v411
      %v413 = vand.u32 %v295, 4294901760
      %414 = vmatprep.subr.mxu0 %v413
      %v415 = vand.u32 %v294, 4294901760
      %416 = vmatpush1.msra.mxu0 %v415
      %v417 = vand.u32 %v297, 4294901760
      %418 = vmatprep.subr.mxu0 %v417
      %v419 = vand.u32 %v296, 4294901760
      %420 = vmatpush1.msra.mxu0 %v419
      %v421 = vand.u32 %v299, 4294901760
      %422 = vmatprep.subr.mxu0 %v421
      %v423 = vand.u32 %v298, 4294901760
      %424 = vmatpush1.msra.mxu0 %v423
      %v425 = vand.u32 %v301, 4294901760
      %426 = vmatprep.subr.mxu0 %v425
      %v427 = vand.u32 %v300, 4294901760
      %428 = vmatpush1.msra.mxu0 %v427
      %v429 = vand.u32 %v303, 4294901760
      %430 = vmatprep.subr.mxu0 %v429
      %v431 = vand.u32 %v302, 4294901760
      %432 = vmatpush1.msra.mxu0 %v431
      %v433 = vand.u32 %v305, 4294901760
      %434 = vmatprep.subr.mxu0 %v433
      %v435 = vand.u32 %v304, 4294901760
      %436 = vmatpush1.msra.mxu0 %v435
      %v437 = vand.u32 %v307, 4294901760
      %438 = vmatprep.subr.mxu0 %v437
      %v439 = vand.u32 %v306, 4294901760
      %440 = vmatpush1.msra.mxu0 %v439
      %v441 = vand.u32 %v309, 4294901760
      %442 = vmatprep.subr.mxu0 %v441
      %v443 = vand.u32 %v308, 4294901760
      %444 = vmatpush1.msra.mxu0 %v443
      %v445 = vand.u32 %v311, 4294901760
      %446 = vmatprep.subr.mxu0 %v445
      %v447 = vand.u32 %v310, 4294901760
      %448 = vmatpush1.msra.mxu0 %v447
      %v449 = vand.u32 %v313, 4294901760
      %450 = vmatprep.subr.mxu0 %v449
      %v451 = vand.u32 %v312, 4294901760
      %452 = vmatpush1.msra.mxu0 %v451
      %v453 = vand.u32 %v322, 4294901760
      %v454 = vsub.f32 %v322, %v453
      %v455 = vand.u32 %v454, 4294901760
      %v456 = vsub.f32 %v454, %v455
      %v457 = vand.u32 %v456, 4294901760
      %458 = vmatprep.mubr.f32.mxu0 %v457
      %v459 = vand.u32 %v321, 4294901760
      %v460 = vsub.f32 %v321, %v459
      %v461 = vand.u32 %v460, 4294901760
      %v462 = vsub.f32 %v460, %v461
      %v463 = vand.u32 %v462, 4294901760
      %464 = vmatmul.mubr.f32.gmra.mrb[0].mxu0 %v463
      %v465 = vpop.f32.mrb[0].mxu0
      %v466 = vadd.f32 0.0, %v465
      %v467 = vpop.f32.mrb[0].mxu0
      %v468 = vadd.f32 0.0, %v467
      %469 = vdwg.mxu0
      %v470 = vand.u32 %v251, 4294901760
      %v471 = vsub.f32 %v251, %v470
      %v472 = vand.u32 %v471, 4294901760
      %v473 = vsub.f32 %v471, %v472
      %v474 = vand.u32 %v473, 4294901760
      %475 = vmatprep.subr.mxu0 %v474
      %v476 = vand.u32 %v250, 4294901760
      %v477 = vsub.f32 %v250, %v476
      %v478 = vand.u32 %v477, 4294901760
      %v479 = vsub.f32 %v477, %v478
      %v480 = vand.u32 %v479, 4294901760
      %481 = vmatpush1.msra.mxu0 %v480
      %v482 = vand.u32 %v253, 4294901760
      %v483 = vsub.f32 %v253, %v482
      %v484 = vand.u32 %v483, 4294901760
      %v485 = vsub.f32 %v483, %v484
      %v486 = vand.u32 %v485, 4294901760
      %487 = vmatprep.subr.mxu0 %v486
      %v488 = vand.u32 %v252, 4294901760
      %v489 = vsub.f32 %v252, %v488
      %v490 = vand.u32 %v489, 4294901760
      %v491 = vsub.f32 %v489, %v490
      %v492 = vand.u32 %v491, 4294901760
      %493 = vmatpush1.msra.mxu0 %v492
      %v494 = vand.u32 %v255, 4294901760
      %v495 = vsub.f32 %v255, %v494
      %v496 = vand.u32 %v495, 4294901760
      %v497 = vsub.f32 %v495, %v496
      %v498 = vand.u32 %v497, 4294901760
      %499 = vmatprep.subr.mxu0 %v498
      %v500 = vand.u32 %v254, 4294901760
      %v501 = vsub.f32 %v254, %v500
      %v502 = vand.u32 %v501, 4294901760
      %v503 = vsub.f32 %v501, %v502
      %v504 = vand.u32 %v503, 4294901760
      %505 = vmatpush1.msra.mxu0 %v504
      %v506 = vand.u32 %v257, 4294901760
      %v507 = vsub.f32 %v257, %v506
      %v508 = vand.u32 %v507, 4294901760
      %v509 = vsub.f32 %v507, %v508
      %v510 = vand.u32 %v509, 4294901760
      %511 = vmatprep.subr.mxu0 %v510
      %v512 = vand.u32 %v256, 4294901760
      %v513 = vsub.f32 %v256, %v512
      %v514 = vand.u32 %v513, 4294901760
      %v515 = vsub.f32 %v513, %v514
      %v516 = vand.u32 %v515, 4294901760
      %517 = vmatpush1.msra.mxu0 %v516
      %v518 = vand.u32 %v259, 4294901760
      %v519 = vsub.f32 %v259, %v518
      %v520 = vand.u32 %v519, 4294901760
      %v521 = vsub.f32 %v519, %v520
      %v522 = vand.u32 %v521, 4294901760
      %523 = vmatprep.subr.mxu0 %v522
      %v524 = vand.u32 %v258, 4294901760
      %v525 = vsub.f32 %v258, %v524
      %v526 = vand.u32 %v525, 4294901760
      %v527 = vsub.f32 %v525, %v526
      %v528 = vand.u32 %v527, 4294901760
      %529 = vmatpush1.msra.mxu0 %v528
      %v530 = vand.u32 %v261, 4294901760
      %v531 = vsub.f32 %v261, %v530
      %v532 = vand.u32 %v531, 4294901760
      %v533 = vsub.f32 %v531, %v532
      %v534 = vand.u32 %v533, 4294901760
      %535 = vmatprep.subr.mxu0 %v534
      %v536 = vand.u32 %v260, 4294901760
      %v537 = vsub.f32 %v260, %v536
      %v538 = vand.u32 %v537, 4294901760
      %v539 = vsub.f32 %v537, %v538
      %v540 = vand.u32 %v539, 4294901760
      %541 = vmatpush1.msra.mxu0 %v540
      %v542 = vand.u32 %v263, 4294901760
      %v543 = vsub.f32 %v263, %v542
      %v544 = vand.u32 %v543, 4294901760
      %v545 = vsub.f32 %v543, %v544
      %v546 = vand.u32 %v545, 4294901760
      %547 = vmatprep.subr.mxu0 %v546
      %v548 = vand.u32 %v262, 4294901760
      %v549 = vsub.f32 %v262, %v548
      %v550 = vand.u32 %v549, 4294901760
      %v551 = vsub.f32 %v549, %v550
      %v552 = vand.u32 %v551, 4294901760
      %553 = vmatpush1.msra.mxu0 %v552
      %v554 = vand.u32 %v265, 4294901760
      %v555 = vsub.f32 %v265, %v554
      %v556 = vand.u32 %v555, 4294901760
      %v557 = vsub.f32 %v555, %v556
      %v558 = vand.u32 %v557, 4294901760
      %559 = vmatprep.subr.mxu0 %v558
      %v560 = vand.u32 %v264, 4294901760
      %v561 = vsub.f32 %v264, %v560
      %v562 = vand.u32 %v561, 4294901760
      %v563 = vsub.f32 %v561, %v562
      %v564 = vand.u32 %v563, 4294901760
      %565 = vmatpush1.msra.mxu0 %v564
      %v566 = vand.u32 %v267, 4294901760
      %v567 = vsub.f32 %v267, %v566
      %v568 = vand.u32 %v567, 4294901760
      %v569 = vsub.f32 %v567, %v568
      %v570 = vand.u32 %v569, 4294901760
      %571 = vmatprep.subr.mxu0 %v570
      %v572 = vand.u32 %v266, 4294901760
      %v573 = vsub.f32 %v266, %v572
      %v574 = vand.u32 %v573, 4294901760
      %v575 = vsub.f32 %v573, %v574
      %v576 = vand.u32 %v575, 4294901760
      %577 = vmatpush1.msra.mxu0 %v576
      %v578 = vand.u32 %v269, 4294901760
      %v579 = vsub.f32 %v269, %v578
      %v580 = vand.u32 %v579, 4294901760
      %v581 = vsub.f32 %v579, %v580
      %v582 = vand.u32 %v581, 4294901760
      %583 = vmatprep.subr.mxu0 %v582
      %v584 = vand.u32 %v268, 4294901760
      %v585 = vsub.f32 %v268, %v584
      %v586 = vand.u32 %v585, 4294901760
      %v587 = vsub.f32 %v585, %v586
      %v588 = vand.u32 %v587, 4294901760
      %589 = vmatpush1.msra.mxu0 %v588
      %v590 = vand.u32 %v271, 4294901760
      %v591 = vsub.f32 %v271, %v590
      %v592 = vand.u32 %v591, 4294901760
      %v593 = vsub.f32 %v591, %v592
      %v594 = vand.u32 %v593, 4294901760
      %595 = vmatprep.subr.mxu0 %v594
      %v596 = vand.u32 %v270, 4294901760
      %v597 = vsub.f32 %v270, %v596
      %v598 = vand.u32 %v597, 4294901760
      %v599 = vsub.f32 %v597, %v598
      %v600 = vand.u32 %v599, 4294901760
      %601 = vmatpush1.msra.mxu0 %v600
      %v602 = vand.u32 %v273, 4294901760
      %v603 = vsub.f32 %v273, %v602
      %v604 = vand.u32 %v603, 4294901760
      %v605 = vsub.f32 %v603, %v604
      %v606 = vand.u32 %v605, 4294901760
      %607 = vmatprep.subr.mxu0 %v606
      %v608 = vand.u32 %v272, 4294901760
      %v609 = vsub.f32 %v272, %v608
      %v610 = vand.u32 %v609, 4294901760
      %v611 = vsub.f32 %v609, %v610
      %v612 = vand.u32 %v611, 4294901760
      %613 = vmatpush1.msra.mxu0 %v612
      %v614 = vand.u32 %v275, 4294901760
      %v615 = vsub.f32 %v275, %v614
      %v616 = vand.u32 %v615, 4294901760
      %v617 = vsub.f32 %v615, %v616
      %v618 = vand.u32 %v617, 4294901760
      %619 = vmatprep.subr.mxu0 %v618
      %v620 = vand.u32 %v274, 4294901760
      %v621 = vsub.f32 %v274, %v620
      %v622 = vand.u32 %v621, 4294901760
      %v623 = vsub.f32 %v621, %v622
      %v624 = vand.u32 %v623, 4294901760
      %625 = vmatpush1.msra.mxu0 %v624
      %v626 = vand.u32 %v277, 4294901760
      %v627 = vsub.f32 %v277, %v626
      %v628 = vand.u32 %v627, 4294901760
      %v629 = vsub.f32 %v627, %v628
      %v630 = vand.u32 %v629, 4294901760
      %631 = vmatprep.subr.mxu0 %v630
      %v632 = vand.u32 %v276, 4294901760
      %v633 = vsub.f32 %v276, %v632
      %v634 = vand.u32 %v633, 4294901760
      %v635 = vsub.f32 %v633, %v634
      %v636 = vand.u32 %v635, 4294901760
      %637 = vmatpush1.msra.mxu0 %v636
      %v638 = vand.u32 %v279, 4294901760
      %v639 = vsub.f32 %v279, %v638
      %v640 = vand.u32 %v639, 4294901760
      %v641 = vsub.f32 %v639, %v640
      %v642 = vand.u32 %v641, 4294901760
      %643 = vmatprep.subr.mxu0 %v642
      %v644 = vand.u32 %v278, 4294901760
      %v645 = vsub.f32 %v278, %v644
      %v646 = vand.u32 %v645, 4294901760
      %v647 = vsub.f32 %v645, %v646
      %v648 = vand.u32 %v647, 4294901760
      %649 = vmatpush1.msra.mxu0 %v648
      %v650 = vand.u32 %v281, 4294901760
      %v651 = vsub.f32 %v281, %v650
      %v652 = vand.u32 %v651, 4294901760
      %v653 = vsub.f32 %v651, %v652
      %v654 = vand.u32 %v653, 4294901760
      %655 = vmatprep.subr.mxu0 %v654
      %v656 = vand.u32 %v280, 4294901760
      %v657 = vsub.f32 %v280, %v656
      %v658 = vand.u32 %v657, 4294901760
      %v659 = vsub.f32 %v657, %v658
      %v660 = vand.u32 %v659, 4294901760
      %661 = vmatpush1.msra.mxu0 %v660
      %v662 = vand.u32 %v283, 4294901760
      %v663 = vsub.f32 %v283, %v662
      %v664 = vand.u32 %v663, 4294901760
      %v665 = vsub.f32 %v663, %v664
      %v666 = vand.u32 %v665, 4294901760
      %667 = vmatprep.subr.mxu0 %v666
      %v668 = vand.u32 %v282, 4294901760
      %v669 = vsub.f32 %v282, %v668
      %v670 = vand.u32 %v669, 4294901760
      %v671 = vsub.f32 %v669, %v670
      %v672 = vand.u32 %v671, 4294901760
      %673 = vmatpush1.msra.mxu0 %v672
      %v674 = vand.u32 %v285, 4294901760
      %v675 = vsub.f32 %v285, %v674
      %v676 = vand.u32 %v675, 4294901760
      %v677 = vsub.f32 %v675, %v676
      %v678 = vand.u32 %v677, 4294901760
      %679 = vmatprep.subr.mxu0 %v678
      %v680 = vand.u32 %v284, 4294901760
      %v681 = vsub.f32 %v284, %v680
      %v682 = vand.u32 %v681, 4294901760
      %v683 = vsub.f32 %v681, %v682
      %v684 = vand.u32 %v683, 4294901760
      %685 = vmatpush1.msra.mxu0 %v684
      %v686 = vand.u32 %v287, 4294901760
      %v687 = vsub.f32 %v287, %v686
      %v688 = vand.u32 %v687, 4294901760
      %v689 = vsub.f32 %v687, %v688
      %v690 = vand.u32 %v689, 4294901760
      %691 = vmatprep.subr.mxu0 %v690
      %v692 = vand.u32 %v286, 4294901760
      %v693 = vsub.f32 %v286, %v692
      %v694 = vand.u32 %v693, 4294901760
      %v695 = vsub.f32 %v693, %v694
      %v696 = vand.u32 %v695, 4294901760
      %697 = vmatpush1.msra.mxu0 %v696
      %v698 = vand.u32 %v289, 4294901760
      %v699 = vsub.f32 %v289, %v698
      %v700 = vand.u32 %v699, 4294901760
      %v701 = vsub.f32 %v699, %v700
      %v702 = vand.u32 %v701, 4294901760
      %703 = vmatprep.subr.mxu0 %v702
      %v704 = vand.u32 %v288, 4294901760
      %v705 = vsub.f32 %v288, %v704
      %v706 = vand.u32 %v705, 4294901760
      %v707 = vsub.f32 %v705, %v706
      %v708 = vand.u32 %v707, 4294901760
      %709 = vmatpush1.msra.mxu0 %v708
      %v710 = vand.u32 %v291, 4294901760
      %v711 = vsub.f32 %v291, %v710
      %v712 = vand.u32 %v711, 4294901760
      %v713 = vsub.f32 %v711, %v712
      %v714 = vand.u32 %v713, 4294901760
      %715 = vmatprep.subr.mxu0 %v714
      %v716 = vand.u32 %v290, 4294901760
      %v717 = vsub.f32 %v290, %v716
      %v718 = vand.u32 %v717, 4294901760
      %v719 = vsub.f32 %v717, %v718
      %v720 = vand.u32 %v719, 4294901760
      %721 = vmatpush1.msra.mxu0 %v720
      %v722 = vand.u32 %v293, 4294901760
      %v723 = vsub.f32 %v293, %v722
      %v724 = vand.u32 %v723, 4294901760
      %v725 = vsub.f32 %v723, %v724
      %v726 = vand.u32 %v725, 4294901760
      %727 = vmatprep.subr.mxu0 %v726
      %v728 = vand.u32 %v292, 4294901760
      %v729 = vsub.f32 %v292, %v728
      %v730 = vand.u32 %v729, 4294901760
      %v731 = vsub.f32 %v729, %v730
      %v732 = vand.u32 %v731, 4294901760
      %733 = vmatpush1.msra.mxu0 %v732
      %v734 = vand.u32 %v295, 4294901760
      %v735 = vsub.f32 %v295, %v734
      %v736 = vand.u32 %v735, 4294901760
      %v737 = vsub.f32 %v735, %v736
      %v738 = vand.u32 %v737, 4294901760
      %739 = vmatprep.subr.mxu0 %v738
      %v740 = vand.u32 %v294, 4294901760
      %v741 = vsub.f32 %v294, %v740
      %v742 = vand.u32 %v741, 4294901760
      %v743 = vsub.f32 %v741, %v742
      %v744 = vand.u32 %v743, 4294901760
      %745 = vmatpush1.msra.mxu0 %v744
      %v746 = vand.u32 %v297, 4294901760
      %v747 = vsub.f32 %v297, %v746
      %v748 = vand.u32 %v747, 4294901760
      %v749 = vsub.f32 %v747, %v748
      %v750 = vand.u32 %v749, 4294901760
      %751 = vmatprep.subr.mxu0 %v750
      %v752 = vand.u32 %v296, 4294901760
      %v753 = vsub.f32 %v296, %v752
      %v754 = vand.u32 %v753, 4294901760
      %v755 = vsub.f32 %v753, %v754
      %v756 = vand.u32 %v755, 4294901760
      %757 = vmatpush1.msra.mxu0 %v756
      %v758 = vand.u32 %v299, 4294901760
      %v759 = vsub.f32 %v299, %v758
      %v760 = vand.u32 %v759, 4294901760
      %v761 = vsub.f32 %v759, %v760
      %v762 = vand.u32 %v761, 4294901760
      %763 = vmatprep.subr.mxu0 %v762
      %v764 = vand.u32 %v298, 4294901760
      %v765 = vsub.f32 %v298, %v764
      %v766 = vand.u32 %v765, 4294901760
      %v767 = vsub.f32 %v765, %v766
      %v768 = vand.u32 %v767, 4294901760
      %769 = vmatpush1.msra.mxu0 %v768
      %v770 = vand.u32 %v301, 4294901760
      %v771 = vsub.f32 %v301, %v770
      %v772 = vand.u32 %v771, 4294901760
      %v773 = vsub.f32 %v771, %v772
      %v774 = vand.u32 %v773, 4294901760
      %775 = vmatprep.subr.mxu0 %v774
      %v776 = vand.u32 %v300, 4294901760
      %v777 = vsub.f32 %v300, %v776
      %v778 = vand.u32 %v777, 4294901760
      %v779 = vsub.f32 %v777, %v778
      %v780 = vand.u32 %v779, 4294901760
      %781 = vmatpush1.msra.mxu0 %v780
      %v782 = vand.u32 %v303, 4294901760
      %v783 = vsub.f32 %v303, %v782
      %v784 = vand.u32 %v783, 4294901760
      %v785 = vsub.f32 %v783, %v784
      %v786 = vand.u32 %v785, 4294901760
      %787 = vmatprep.subr.mxu0 %v786
      %v788 = vand.u32 %v302, 4294901760
      %v789 = vsub.f32 %v302, %v788
      %v790 = vand.u32 %v789, 4294901760
      %v791 = vsub.f32 %v789, %v790
      %v792 = vand.u32 %v791, 4294901760
      %793 = vmatpush1.msra.mxu0 %v792
      %v794 = vand.u32 %v305, 4294901760
      %v795 = vsub.f32 %v305, %v794
      %v796 = vand.u32 %v795, 4294901760
      %v797 = vsub.f32 %v795, %v796
      %v798 = vand.u32 %v797, 4294901760
      %799 = vmatprep.subr.mxu0 %v798
      %v800 = vand.u32 %v304, 4294901760
      %v801 = vsub.f32 %v304, %v800
      %v802 = vand.u32 %v801, 4294901760
      %v803 = vsub.f32 %v801, %v802
      %v804 = vand.u32 %v803, 4294901760
      %805 = vmatpush1.msra.mxu0 %v804
      %v806 = vand.u32 %v307, 4294901760
      %v807 = vsub.f32 %v307, %v806
      %v808 = vand.u32 %v807, 4294901760
      %v809 = vsub.f32 %v807, %v808
      %v810 = vand.u32 %v809, 4294901760
      %811 = vmatprep.subr.mxu0 %v810
      %v812 = vand.u32 %v306, 4294901760
      %v813 = vsub.f32 %v306, %v812
      %v814 = vand.u32 %v813, 4294901760
      %v815 = vsub.f32 %v813, %v814
      %v816 = vand.u32 %v815, 4294901760
      %817 = vmatpush1.msra.mxu0 %v816
      %v818 = vand.u32 %v309, 4294901760
      %v819 = vsub.f32 %v309, %v818
      %v820 = vand.u32 %v819, 4294901760
      %v821 = vsub.f32 %v819, %v820
      %v822 = vand.u32 %v821, 4294901760
      %823 = vmatprep.subr.mxu0 %v822
      %v824 = vand.u32 %v308, 4294901760
      %v825 = vsub.f32 %v308, %v824
      %v826 = vand.u32 %v825, 4294901760
      %v827 = vsub.f32 %v825, %v826
      %v828 = vand.u32 %v827, 4294901760
      %829 = vmatpush1.msra.mxu0 %v828
      %v830 = vand.u32 %v311, 4294901760
      %v831 = vsub.f32 %v311, %v830
      %v832 = vand.u32 %v831, 4294901760
      %v833 = vsub.f32 %v831, %v832
      %v834 = vand.u32 %v833, 4294901760
      %835 = vmatprep.subr.mxu0 %v834
      %v836 = vand.u32 %v310, 4294901760
      %v837 = vsub.f32 %v310, %v836
      %v838 = vand.u32 %v837, 4294901760
      %v839 = vsub.f32 %v837, %v838
      %v840 = vand.u32 %v839, 4294901760
      %841 = vmatpush1.msra.mxu0 %v840
      %v842 = vand.u32 %v313, 4294901760
      %v843 = vsub.f32 %v313, %v842
      %v844 = vand.u32 %v843, 4294901760
      %v845 = vsub.f32 %v843, %v844
      %v846 = vand.u32 %v845, 4294901760
      %847 = vmatprep.subr.mxu0 %v846
      %v848 = vand.u32 %v312, 4294901760
      %v849 = vsub.f32 %v312, %v848
      %v850 = vand.u32 %v849, 4294901760
      %v851 = vsub.f32 %v849, %v850
      %v852 = vand.u32 %v851, 4294901760
      %853 = vmatpush1.msra.mxu0 %v852
      %v854 = vand.u32 %v322, 4294901760
      %855 = vmatprep.mubr.f32.mxu0 %v854
      %v856 = vand.u32 %v321, 4294901760
      %857 = vmatmul.mubr.f32.gmra.mrb[0].mxu0 %v856
      %v858 = vpop.f32.mrb[0].mxu0
      %v859 = vadd.f32 %v466, %v858
      %v860 = vpop.f32.mrb[0].mxu0
      %v861 = vadd.f32 %v468, %v860
      %862 = vdwg.mxu0
      %v863 = vand.u32 %v251, 4294901760
      %v864 = vsub.f32 %v251, %v863
      %865 = vmatprep.subr.mxu0 %v864
      %v866 = vand.u32 %v250, 4294901760
      %v867 = vsub.f32 %v250, %v866
      %868 = vmatpush1.msra.mxu0 %v867
      %v869 = vand.u32 %v253, 4294901760
      %v870 = vsub.f32 %v253, %v869
      %871 = vmatprep.subr.mxu0 %v870
      %v872 = vand.u32 %v252, 4294901760
      %v873 = vsub.f32 %v252, %v872
      %874 = vmatpush1.msra.mxu0 %v873
      %v875 = vand.u32 %v255, 4294901760
      %v876 = vsub.f32 %v255, %v875
      %877 = vmatprep.subr.mxu0 %v876
      %v878 = vand.u32 %v254, 4294901760
      %v879 = vsub.f32 %v254, %v878
      %880 = vmatpush1.msra.mxu0 %v879
      %v881 = vand.u32 %v257, 4294901760
      %v882 = vsub.f32 %v257, %v881
      %883 = vmatprep.subr.mxu0 %v882
      %v884 = vand.u32 %v256, 4294901760
      %v885 = vsub.f32 %v256, %v884
      %886 = vmatpush1.msra.mxu0 %v885
      %v887 = vand.u32 %v259, 4294901760
      %v888 = vsub.f32 %v259, %v887
      %889 = vmatprep.subr.mxu0 %v888
      %v890 = vand.u32 %v258, 4294901760
      %v891 = vsub.f32 %v258, %v890
      %892 = vmatpush1.msra.mxu0 %v891
      %v893 = vand.u32 %v261, 4294901760
      %v894 = vsub.f32 %v261, %v893
      %895 = vmatprep.subr.mxu0 %v894
      %v896 = vand.u32 %v260, 4294901760
      %v897 = vsub.f32 %v260, %v896
      %898 = vmatpush1.msra.mxu0 %v897
      %v899 = vand.u32 %v263, 4294901760
      %v900 = vsub.f32 %v263, %v899
      %901 = vmatprep.subr.mxu0 %v900
      %v902 = vand.u32 %v262, 4294901760
      %v903 = vsub.f32 %v262, %v902
      %904 = vmatpush1.msra.mxu0 %v903
      %v905 = vand.u32 %v265, 4294901760
      %v906 = vsub.f32 %v265, %v905
      %907 = vmatprep.subr.mxu0 %v906
      %v908 = vand.u32 %v264, 4294901760
      %v909 = vsub.f32 %v264, %v908
      %910 = vmatpush1.msra.mxu0 %v909
      %v911 = vand.u32 %v267, 4294901760
      %v912 = vsub.f32 %v267, %v911
      %913 = vmatprep.subr.mxu0 %v912
      %v914 = vand.u32 %v266, 4294901760
      %v915 = vsub.f32 %v266, %v914
      %916 = vmatpush1.msra.mxu0 %v915
      %v917 = vand.u32 %v269, 4294901760
      %v918 = vsub.f32 %v269, %v917
      %919 = vmatprep.subr.mxu0 %v918
      %v920 = vand.u32 %v268, 4294901760
      %v921 = vsub.f32 %v268, %v920
      %922 = vmatpush1.msra.mxu0 %v921
      %v923 = vand.u32 %v271, 4294901760
      %v924 = vsub.f32 %v271, %v923
      %925 = vmatprep.subr.mxu0 %v924
      %v926 = vand.u32 %v270, 4294901760
      %v927 = vsub.f32 %v270, %v926
      %928 = vmatpush1.msra.mxu0 %v927
      %v929 = vand.u32 %v273, 4294901760
      %v930 = vsub.f32 %v273, %v929
      %931 = vmatprep.subr.mxu0 %v930
      %v932 = vand.u32 %v272, 4294901760
      %v933 = vsub.f32 %v272, %v932
      %934 = vmatpush1.msra.mxu0 %v933
      %v935 = vand.u32 %v275, 4294901760
      %v936 = vsub.f32 %v275, %v935
      %937 = vmatprep.subr.mxu0 %v936
      %v938 = vand.u32 %v274, 4294901760
      %v939 = vsub.f32 %v274, %v938
      %940 = vmatpush1.msra.mxu0 %v939
      %v941 = vand.u32 %v277, 4294901760
      %v942 = vsub.f32 %v277, %v941
      %943 = vmatprep.subr.mxu0 %v942
      %v944 = vand.u32 %v276, 4294901760
      %v945 = vsub.f32 %v276, %v944
      %946 = vmatpush1.msra.mxu0 %v945
      %v947 = vand.u32 %v279, 4294901760
      %v948 = vsub.f32 %v279, %v947
      %949 = vmatprep.subr.mxu0 %v948
      %v950 = vand.u32 %v278, 4294901760
      %v951 = vsub.f32 %v278, %v950
      %952 = vmatpush1.msra.mxu0 %v951
      %v953 = vand.u32 %v281, 4294901760
      %v954 = vsub.f32 %v281, %v953
      %955 = vmatprep.subr.mxu0 %v954
      %v956 = vand.u32 %v280, 4294901760
      %v957 = vsub.f32 %v280, %v956
      %958 = vmatpush1.msra.mxu0 %v957
      %v959 = vand.u32 %v283, 4294901760
      %v960 = vsub.f32 %v283, %v959
      %961 = vmatprep.subr.mxu0 %v960
      %v962 = vand.u32 %v282, 4294901760
      %v963 = vsub.f32 %v282, %v962
      %964 = vmatpush1.msra.mxu0 %v963
      %v965 = vand.u32 %v285, 4294901760
      %v966 = vsub.f32 %v285, %v965
      %967 = vmatprep.subr.mxu0 %v966
      %v968 = vand.u32 %v284, 4294901760
      %v969 = vsub.f32 %v284, %v968
      %970 = vmatpush1.msra.mxu0 %v969
      %v971 = vand.u32 %v287, 4294901760
      %v972 = vsub.f32 %v287, %v971
      %973 = vmatprep.subr.mxu0 %v972
      %v974 = vand.u32 %v286, 4294901760
      %v975 = vsub.f32 %v286, %v974
      %976 = vmatpush1.msra.mxu0 %v975
      %v977 = vand.u32 %v289, 4294901760
      %v978 = vsub.f32 %v289, %v977
      %979 = vmatprep.subr.mxu0 %v978
      %v980 = vand.u32 %v288, 4294901760
      %v981 = vsub.f32 %v288, %v980
      %982 = vmatpush1.msra.mxu0 %v981
      %v983 = vand.u32 %v291, 4294901760
      %v984 = vsub.f32 %v291, %v983
      %985 = vmatprep.subr.mxu0 %v984
      %v986 = vand.u32 %v290, 4294901760
      %v987 = vsub.f32 %v290, %v986
      %988 = vmatpush1.msra.mxu0 %v987
      %v989 = vand.u32 %v293, 4294901760
      %v990 = vsub.f32 %v293, %v989
      %991 = vmatprep.subr.mxu0 %v990
      %v992 = vand.u32 %v292, 4294901760
      %v993 = vsub.f32 %v292, %v992
      %994 = vmatpush1.msra.mxu0 %v993
      %v995 = vand.u32 %v295, 4294901760
      %v996 = vsub.f32 %v295, %v995
      %997 = vmatprep.subr.mxu0 %v996
      %v998 = vand.u32 %v294, 4294901760
      %v999 = vsub.f32 %v294, %v998
      %1000 = vmatpush1.msra.mxu0 %v999
      %v1001 = vand.u32 %v297, 4294901760
      %v1002 = vsub.f32 %v297, %v1001
      %1003 = vmatprep.subr.mxu0 %v1002
      %v1004 = vand.u32 %v296, 4294901760
      %v1005 = vsub.f32 %v296, %v1004
      %1006 = vmatpush1.msra.mxu0 %v1005
      %v1007 = vand.u32 %v299, 4294901760
      %v1008 = vsub.f32 %v299, %v1007
      %1009 = vmatprep.subr.mxu0 %v1008
      %v1010 = vand.u32 %v298, 4294901760
      %v1011 = vsub.f32 %v298, %v1010
      %1012 = vmatpush1.msra.mxu0 %v1011
      %v1013 = vand.u32 %v301, 4294901760
      %v1014 = vsub.f32 %v301, %v1013
      %1015 = vmatprep.subr.mxu0 %v1014
      %v1016 = vand.u32 %v300, 4294901760
      %v1017 = vsub.f32 %v300, %v1016
      %1018 = vmatpush1.msra.mxu0 %v1017
      %v1019 = vand.u32 %v303, 4294901760
      %v1020 = vsub.f32 %v303, %v1019
      %1021 = vmatprep.subr.mxu0 %v1020
      %v1022 = vand.u32 %v302, 4294901760
      %v1023 = vsub.f32 %v302, %v1022
      %1024 = vmatpush1.msra.mxu0 %v1023
      %v1025 = vand.u32 %v305, 4294901760
      %v1026 = vsub.f32 %v305, %v1025
      %1027 = vmatprep.subr.mxu0 %v1026
      %v1028 = vand.u32 %v304, 4294901760
      %v1029 = vsub.f32 %v304, %v1028
      %1030 = vmatpush1.msra.mxu0 %v1029
      %v1031 = vand.u32 %v307, 4294901760
      %v1032 = vsub.f32 %v307, %v1031
      %1033 = vmatprep.subr.mxu0 %v1032
      %v1034 = vand.u32 %v306, 4294901760
      %v1035 = vsub.f32 %v306, %v1034
      %1036 = vmatpush1.msra.mxu0 %v1035
      %v1037 = vand.u32 %v309, 4294901760
      %v1038 = vsub.f32 %v309, %v1037
      %1039 = vmatprep.subr.mxu0 %v1038
      %v1040 = vand.u32 %v308, 4294901760
      %v1041 = vsub.f32 %v308, %v1040
      %1042 = vmatpush1.msra.mxu0 %v1041
      %v1043 = vand.u32 %v311, 4294901760
      %v1044 = vsub.f32 %v311, %v1043
      %1045 = vmatprep.subr.mxu0 %v1044
      %v1046 = vand.u32 %v310, 4294901760
      %v1047 = vsub.f32 %v310, %v1046
      %1048 = vmatpush1.msra.mxu0 %v1047
      %v1049 = vand.u32 %v313, 4294901760
      %v1050 = vsub.f32 %v313, %v1049
      %1051 = vmatprep.subr.mxu0 %v1050
      %v1052 = vand.u32 %v312, 4294901760
      %v1053 = vsub.f32 %v312, %v1052
      %1054 = vmatpush1.msra.mxu0 %v1053
      %v1055 = vand.u32 %v322, 4294901760
      %v1056 = vsub.f32 %v322, %v1055
      %1057 = vmatprep.mubr.f32.mxu0 %v1056
      %v1058 = vand.u32 %v321, 4294901760
      %v1059 = vsub.f32 %v321, %v1058
      %1060 = vmatmul.mubr.f32.gmra.mrb[0].mxu0 %v1059
      %v1061 = vpop.f32.mrb[0].mxu0
      %v1062 = vadd.f32 %v859, %v1061
      %v1063 = vpop.f32.mrb[0].mxu0
      %v1064 = vadd.f32 %v861, %v1063
      %1065 = vdwg.mxu0
      %v1066 = vand.u32 %v251, 4294901760
      %1067 = vmatprep.subr.mxu0 %v1066
      %v1068 = vand.u32 %v250, 4294901760
      %1069 = vmatpush1.msra.mxu0 %v1068
      %v1070 = vand.u32 %v253, 4294901760
      %1071 = vmatprep.subr.mxu0 %v1070
      %v1072 = vand.u32 %v252, 4294901760
      %1073 = vmatpush1.msra.mxu0 %v1072
      %v1074 = vand.u32 %v255, 4294901760
      %1075 = vmatprep.subr.mxu0 %v1074
      %v1076 = vand.u32 %v254, 4294901760
      %1077 = vmatpush1.msra.mxu0 %v1076
      %v1078 = vand.u32 %v257, 4294901760
      %1079 = vmatprep.subr.mxu0 %v1078
      %v1080 = vand.u32 %v256, 4294901760
      %1081 = vmatpush1.msra.mxu0 %v1080
      %v1082 = vand.u32 %v259, 4294901760
      %1083 = vmatprep.subr.mxu0 %v1082
      %v1084 = vand.u32 %v258, 4294901760
      %1085 = vmatpush1.msra.mxu0 %v1084
      %v1086 = vand.u32 %v261, 4294901760
      %1087 = vmatprep.subr.mxu0 %v1086
      %v1088 = vand.u32 %v260, 4294901760
      %1089 = vmatpush1.msra.mxu0 %v1088
      %v1090 = vand.u32 %v263, 4294901760
      %1091 = vmatprep.subr.mxu0 %v1090
      %v1092 = vand.u32 %v262, 4294901760
      %1093 = vmatpush1.msra.mxu0 %v1092
      %v1094 = vand.u32 %v265, 4294901760
      %1095 = vmatprep.subr.mxu0 %v1094
      %v1096 = vand.u32 %v264, 4294901760
      %1097 = vmatpush1.msra.mxu0 %v1096
      %v1098 = vand.u32 %v267, 4294901760
      %1099 = vmatprep.subr.mxu0 %v1098
      %v1100 = vand.u32 %v266, 4294901760
      %1101 = vmatpush1.msra.mxu0 %v1100
      %v1102 = vand.u32 %v269, 4294901760
      %1103 = vmatprep.subr.mxu0 %v1102
      %v1104 = vand.u32 %v268, 4294901760
      %1105 = vmatpush1.msra.mxu0 %v1104
      %v1106 = vand.u32 %v271, 4294901760
      %1107 = vmatprep.subr.mxu0 %v1106
      %v1108 = vand.u32 %v270, 4294901760
      %1109 = vmatpush1.msra.mxu0 %v1108
      %v1110 = vand.u32 %v273, 4294901760
      %1111 = vmatprep.subr.mxu0 %v1110
      %v1112 = vand.u32 %v272, 4294901760
      %1113 = vmatpush1.msra.mxu0 %v1112
      %v1114 = vand.u32 %v275, 4294901760
      %1115 = vmatprep.subr.mxu0 %v1114
      %v1116 = vand.u32 %v274, 4294901760
      %1117 = vmatpush1.msra.mxu0 %v1116
      %v1118 = vand.u32 %v277, 4294901760
      %1119 = vmatprep.subr.mxu0 %v1118
      %v1120 = vand.u32 %v276, 4294901760
      %1121 = vmatpush1.msra.mxu0 %v1120
      %v1122 = vand.u32 %v279, 4294901760
      %1123 = vmatprep.subr.mxu0 %v1122
      %v1124 = vand.u32 %v278, 4294901760
      %1125 = vmatpush1.msra.mxu0 %v1124
      %v1126 = vand.u32 %v281, 4294901760
      %1127 = vmatprep.subr.mxu0 %v1126
      %v1128 = vand.u32 %v280, 4294901760
      %1129 = vmatpush1.msra.mxu0 %v1128
      %v1130 = vand.u32 %v283, 4294901760
      %1131 = vmatprep.subr.mxu0 %v1130
      %v1132 = vand.u32 %v282, 4294901760
      %1133 = vmatpush1.msra.mxu0 %v1132
      %v1134 = vand.u32 %v285, 4294901760
      %1135 = vmatprep.subr.mxu0 %v1134
      %v1136 = vand.u32 %v284, 4294901760
      %1137 = vmatpush1.msra.mxu0 %v1136
      %v1138 = vand.u32 %v287, 4294901760
      %1139 = vmatprep.subr.mxu0 %v1138
      %v1140 = vand.u32 %v286, 4294901760
      %1141 = vmatpush1.msra.mxu0 %v1140
      %v1142 = vand.u32 %v289, 4294901760
      %1143 = vmatprep.subr.mxu0 %v1142
      %v1144 = vand.u32 %v288, 4294901760
      %1145 = vmatpush1.msra.mxu0 %v1144
      %v1146 = vand.u32 %v291, 4294901760
      %1147 = vmatprep.subr.mxu0 %v1146
      %v1148 = vand.u32 %v290, 4294901760
      %1149 = vmatpush1.msra.mxu0 %v1148
      %v1150 = vand.u32 %v293, 4294901760
      %1151 = vmatprep.subr.mxu0 %v1150
      %v1152 = vand.u32 %v292, 4294901760
      %1153 = vmatpush1.msra.mxu0 %v1152
      %v1154 = vand.u32 %v295, 4294901760
      %1155 = vmatprep.subr.mxu0 %v1154
      %v1156 = vand.u32 %v294, 4294901760
      %1157 = vmatpush1.msra.mxu0 %v1156
      %v1158 = vand.u32 %v297, 4294901760
      %1159 = vmatprep.subr.mxu0 %v1158
      %v1160 = vand.u32 %v296, 4294901760
      %1161 = vmatpush1.msra.mxu0 %v1160
      %v1162 = vand.u32 %v299, 4294901760
      %1163 = vmatprep.subr.mxu0 %v1162
      %v1164 = vand.u32 %v298, 4294901760
      %1165 = vmatpush1.msra.mxu0 %v1164
      %v1166 = vand.u32 %v301, 4294901760
      %1167 = vmatprep.subr.mxu0 %v1166
      %v1168 = vand.u32 %v300, 4294901760
      %1169 = vmatpush1.msra.mxu0 %v1168
      %v1170 = vand.u32 %v303, 4294901760
      %1171 = vmatprep.subr.mxu0 %v1170
      %v1172 = vand.u32 %v302, 4294901760
      %1173 = vmatpush1.msra.mxu0 %v1172
      %v1174 = vand.u32 %v305, 4294901760
      %1175 = vmatprep.subr.mxu0 %v1174
      %v1176 = vand.u32 %v304, 4294901760
      %1177 = vmatpush1.msra.mxu0 %v1176
      %v1178 = vand.u32 %v307, 4294901760
      %1179 = vmatprep.subr.mxu0 %v1178
      %v1180 = vand.u32 %v306, 4294901760
      %1181 = vmatpush1.msra.mxu0 %v1180
      %v1182 = vand.u32 %v309, 4294901760
      %1183 = vmatprep.subr.mxu0 %v1182
      %v1184 = vand.u32 %v308, 4294901760
      %1185 = vmatpush1.msra.mxu0 %v1184
      %v1186 = vand.u32 %v311, 4294901760
      %1187 = vmatprep.subr.mxu0 %v1186
      %v1188 = vand.u32 %v310, 4294901760
      %1189 = vmatpush1.msra.mxu0 %v1188
      %v1190 = vand.u32 %v313, 4294901760
      %1191 = vmatprep.subr.mxu0 %v1190
      %v1192 = vand.u32 %v312, 4294901760
      %1193 = vmatpush1.msra.mxu0 %v1192
      %v1194 = vand.u32 %v322, 4294901760
      %v1195 = vsub.f32 %v322, %v1194
      %v1196 = vand.u32 %v1195, 4294901760
      %1197 = vmatprep.mubr.f32.mxu0 %v1196
      %v1198 = vand.u32 %v321, 4294901760
      %v1199 = vsub.f32 %v321, %v1198
      %v1200 = vand.u32 %v1199, 4294901760
      %1201 = vmatmul.mubr.f32.gmra.mrb[0].mxu0 %v1200
      %v1202 = vpop.f32.mrb[0].mxu0
      %v1203 = vadd.f32 %v1062, %v1202
      %v1204 = vpop.f32.mrb[0].mxu0
      %v1205 = vadd.f32 %v1064, %v1204
      %1206 = vdwg.mxu0
      %v1207 = vand.u32 %v251, 4294901760
      %v1208 = vsub.f32 %v251, %v1207
      %v1209 = vand.u32 %v1208, 4294901760
      %1210 = vmatprep.subr.mxu0 %v1209
      %v1211 = vand.u32 %v250, 4294901760
      %v1212 = vsub.f32 %v250, %v1211
      %v1213 = vand.u32 %v1212, 4294901760
      %1214 = vmatpush1.msra.mxu0 %v1213
      %v1215 = vand.u32 %v253, 4294901760
      %v1216 = vsub.f32 %v253, %v1215
      %v1217 = vand.u32 %v1216, 4294901760
      %1218 = vmatprep.subr.mxu0 %v1217
      %v1219 = vand.u32 %v252, 4294901760
      %v1220 = vsub.f32 %v252, %v1219
      %v1221 = vand.u32 %v1220, 4294901760
      %1222 = vmatpush1.msra.mxu0 %v1221
      %v1223 = vand.u32 %v255, 4294901760
      %v1224 = vsub.f32 %v255, %v1223
      %v1225 = vand.u32 %v1224, 4294901760
      %1226 = vmatprep.subr.mxu0 %v1225
      %v1227 = vand.u32 %v254, 4294901760
      %v1228 = vsub.f32 %v254, %v1227
      %v1229 = vand.u32 %v1228, 4294901760
      %1230 = vmatpush1.msra.mxu0 %v1229
      %v1231 = vand.u32 %v257, 4294901760
      %v1232 = vsub.f32 %v257, %v1231
      %v1233 = vand.u32 %v1232, 4294901760
      %1234 = vmatprep.subr.mxu0 %v1233
      %v1235 = vand.u32 %v256, 4294901760
      %v1236 = vsub.f32 %v256, %v1235
      %v1237 = vand.u32 %v1236, 4294901760
      %1238 = vmatpush1.msra.mxu0 %v1237
      %v1239 = vand.u32 %v259, 4294901760
      %v1240 = vsub.f32 %v259, %v1239
      %v1241 = vand.u32 %v1240, 4294901760
      %1242 = vmatprep.subr.mxu0 %v1241
      %v1243 = vand.u32 %v258, 4294901760
      %v1244 = vsub.f32 %v258, %v1243
      %v1245 = vand.u32 %v1244, 4294901760
      %1246 = vmatpush1.msra.mxu0 %v1245
      %v1247 = vand.u32 %v261, 4294901760
      %v1248 = vsub.f32 %v261, %v1247
      %v1249 = vand.u32 %v1248, 4294901760
      %1250 = vmatprep.subr.mxu0 %v1249
      %v1251 = vand.u32 %v260, 4294901760
      %v1252 = vsub.f32 %v260, %v1251
      %v1253 = vand.u32 %v1252, 4294901760
      %1254 = vmatpush1.msra.mxu0 %v1253
      %v1255 = vand.u32 %v263, 4294901760
      %v1256 = vsub.f32 %v263, %v1255
      %v1257 = vand.u32 %v1256, 4294901760
      %1258 = vmatprep.subr.mxu0 %v1257
      %v1259 = vand.u32 %v262, 4294901760
      %v1260 = vsub.f32 %v262, %v1259
      %v1261 = vand.u32 %v1260, 4294901760
      %1262 = vmatpush1.msra.mxu0 %v1261
      %v1263 = vand.u32 %v265, 4294901760
      %v1264 = vsub.f32 %v265, %v1263
      %v1265 = vand.u32 %v1264, 4294901760
      %1266 = vmatprep.subr.mxu0 %v1265
      %v1267 = vand.u32 %v264, 4294901760
      %v1268 = vsub.f32 %v264, %v1267
      %v1269 = vand.u32 %v1268, 4294901760
      %1270 = vmatpush1.msra.mxu0 %v1269
      %v1271 = vand.u32 %v267, 4294901760
      %v1272 = vsub.f32 %v267, %v1271
      %v1273 = vand.u32 %v1272, 4294901760
      %1274 = vmatprep.subr.mxu0 %v1273
      %v1275 = vand.u32 %v266, 4294901760
      %v1276 = vsub.f32 %v266, %v1275
      %v1277 = vand.u32 %v1276, 4294901760
      %1278 = vmatpush1.msra.mxu0 %v1277
      %v1279 = vand.u32 %v269, 4294901760
      %v1280 = vsub.f32 %v269, %v1279
      %v1281 = vand.u32 %v1280, 4294901760
      %1282 = vmatprep.subr.mxu0 %v1281
      %v1283 = vand.u32 %v268, 4294901760
      %v1284 = vsub.f32 %v268, %v1283
      %v1285 = vand.u32 %v1284, 4294901760
      %1286 = vmatpush1.msra.mxu0 %v1285
      %v1287 = vand.u32 %v271, 4294901760
      %v1288 = vsub.f32 %v271, %v1287
      %v1289 = vand.u32 %v1288, 4294901760
      %1290 = vmatprep.subr.mxu0 %v1289
      %v1291 = vand.u32 %v270, 4294901760
      %v1292 = vsub.f32 %v270, %v1291
      %v1293 = vand.u32 %v1292, 4294901760
      %1294 = vmatpush1.msra.mxu0 %v1293
      %v1295 = vand.u32 %v273, 4294901760
      %v1296 = vsub.f32 %v273, %v1295
      %v1297 = vand.u32 %v1296, 4294901760
      %1298 = vmatprep.subr.mxu0 %v1297
      %v1299 = vand.u32 %v272, 4294901760
      %v1300 = vsub.f32 %v272, %v1299
      %v1301 = vand.u32 %v1300, 4294901760
      %1302 = vmatpush1.msra.mxu0 %v1301
      %v1303 = vand.u32 %v275, 4294901760
      %v1304 = vsub.f32 %v275, %v1303
      %v1305 = vand.u32 %v1304, 4294901760
      %1306 = vmatprep.subr.mxu0 %v1305
      %v1307 = vand.u32 %v274, 4294901760
      %v1308 = vsub.f32 %v274, %v1307
      %v1309 = vand.u32 %v1308, 4294901760
      %1310 = vmatpush1.msra.mxu0 %v1309
      %v1311 = vand.u32 %v277, 4294901760
      %v1312 = vsub.f32 %v277, %v1311
      %v1313 = vand.u32 %v1312, 4294901760
      %1314 = vmatprep.subr.mxu0 %v1313
      %v1315 = vand.u32 %v276, 4294901760
      %v1316 = vsub.f32 %v276, %v1315
      %v1317 = vand.u32 %v1316, 4294901760
      %1318 = vmatpush1.msra.mxu0 %v1317
      %v1319 = vand.u32 %v279, 4294901760
      %v1320 = vsub.f32 %v279, %v1319
      %v1321 = vand.u32 %v1320, 4294901760
      %1322 = vmatprep.subr.mxu0 %v1321
      %v1323 = vand.u32 %v278, 4294901760
      %v1324 = vsub.f32 %v278, %v1323
      %v1325 = vand.u32 %v1324, 4294901760
      %1326 = vmatpush1.msra.mxu0 %v1325
      %v1327 = vand.u32 %v281, 4294901760
      %v1328 = vsub.f32 %v281, %v1327
      %v1329 = vand.u32 %v1328, 4294901760
      %1330 = vmatprep.subr.mxu0 %v1329
      %v1331 = vand.u32 %v280, 4294901760
      %v1332 = vsub.f32 %v280, %v1331
      %v1333 = vand.u32 %v1332, 4294901760
      %1334 = vmatpush1.msra.mxu0 %v1333
      %v1335 = vand.u32 %v283, 4294901760
      %v1336 = vsub.f32 %v283, %v1335
      %v1337 = vand.u32 %v1336, 4294901760
      %1338 = vmatprep.subr.mxu0 %v1337
      %v1339 = vand.u32 %v282, 4294901760
      %v1340 = vsub.f32 %v282, %v1339
      %v1341 = vand.u32 %v1340, 4294901760
      %1342 = vmatpush1.msra.mxu0 %v1341
      %v1343 = vand.u32 %v285, 4294901760
      %v1344 = vsub.f32 %v285, %v1343
      %v1345 = vand.u32 %v1344, 4294901760
      %1346 = vmatprep.subr.mxu0 %v1345
      %v1347 = vand.u32 %v284, 4294901760
      %v1348 = vsub.f32 %v284, %v1347
      %v1349 = vand.u32 %v1348, 4294901760
      %1350 = vmatpush1.msra.mxu0 %v1349
      %v1351 = vand.u32 %v287, 4294901760
      %v1352 = vsub.f32 %v287, %v1351
      %v1353 = vand.u32 %v1352, 4294901760
      %1354 = vmatprep.subr.mxu0 %v1353
      %v1355 = vand.u32 %v286, 4294901760
      %v1356 = vsub.f32 %v286, %v1355
      %v1357 = vand.u32 %v1356, 4294901760
      %1358 = vmatpush1.msra.mxu0 %v1357
      %v1359 = vand.u32 %v289, 4294901760
      %v1360 = vsub.f32 %v289, %v1359
      %v1361 = vand.u32 %v1360, 4294901760
      %1362 = vmatprep.subr.mxu0 %v1361
      %v1363 = vand.u32 %v288, 4294901760
      %v1364 = vsub.f32 %v288, %v1363
      %v1365 = vand.u32 %v1364, 4294901760
      %1366 = vmatpush1.msra.mxu0 %v1365
      %v1367 = vand.u32 %v291, 4294901760
      %v1368 = vsub.f32 %v291, %v1367
      %v1369 = vand.u32 %v1368, 4294901760
      %1370 = vmatprep.subr.mxu0 %v1369
      %v1371 = vand.u32 %v290, 4294901760
      %v1372 = vsub.f32 %v290, %v1371
      %v1373 = vand.u32 %v1372, 4294901760
      %1374 = vmatpush1.msra.mxu0 %v1373
      %v1375 = vand.u32 %v293, 4294901760
      %v1376 = vsub.f32 %v293, %v1375
      %v1377 = vand.u32 %v1376, 4294901760
      %1378 = vmatprep.subr.mxu0 %v1377
      %v1379 = vand.u32 %v292, 4294901760
      %v1380 = vsub.f32 %v292, %v1379
      %v1381 = vand.u32 %v1380, 4294901760
      %1382 = vmatpush1.msra.mxu0 %v1381
      %v1383 = vand.u32 %v295, 4294901760
      %v1384 = vsub.f32 %v295, %v1383
      %v1385 = vand.u32 %v1384, 4294901760
      %1386 = vmatprep.subr.mxu0 %v1385
      %v1387 = vand.u32 %v294, 4294901760
      %v1388 = vsub.f32 %v294, %v1387
      %v1389 = vand.u32 %v1388, 4294901760
      %1390 = vmatpush1.msra.mxu0 %v1389
      %v1391 = vand.u32 %v297, 4294901760
      %v1392 = vsub.f32 %v297, %v1391
      %v1393 = vand.u32 %v1392, 4294901760
      %1394 = vmatprep.subr.mxu0 %v1393
      %v1395 = vand.u32 %v296, 4294901760
      %v1396 = vsub.f32 %v296, %v1395
      %v1397 = vand.u32 %v1396, 4294901760
      %1398 = vmatpush1.msra.mxu0 %v1397
      %v1399 = vand.u32 %v299, 4294901760
      %v1400 = vsub.f32 %v299, %v1399
      %v1401 = vand.u32 %v1400, 4294901760
      %1402 = vmatprep.subr.mxu0 %v1401
      %v1403 = vand.u32 %v298, 4294901760
      %v1404 = vsub.f32 %v298, %v1403
      %v1405 = vand.u32 %v1404, 4294901760
      %1406 = vmatpush1.msra.mxu0 %v1405
      %v1407 = vand.u32 %v301, 4294901760
      %v1408 = vsub.f32 %v301, %v1407
      %v1409 = vand.u32 %v1408, 4294901760
      %1410 = vmatprep.subr.mxu0 %v1409
      %v1411 = vand.u32 %v300, 4294901760
      %v1412 = vsub.f32 %v300, %v1411
      %v1413 = vand.u32 %v1412, 4294901760
      %1414 = vmatpush1.msra.mxu0 %v1413
      %v1415 = vand.u32 %v303, 4294901760
      %v1416 = vsub.f32 %v303, %v1415
      %v1417 = vand.u32 %v1416, 4294901760
      %1418 = vmatprep.subr.mxu0 %v1417
      %v1419 = vand.u32 %v302, 4294901760
      %v1420 = vsub.f32 %v302, %v1419
      %v1421 = vand.u32 %v1420, 4294901760
      %1422 = vmatpush1.msra.mxu0 %v1421
      %v1423 = vand.u32 %v305, 4294901760
      %v1424 = vsub.f32 %v305, %v1423
      %v1425 = vand.u32 %v1424, 4294901760
      %1426 = vmatprep.subr.mxu0 %v1425
      %v1427 = vand.u32 %v304, 4294901760
      %v1428 = vsub.f32 %v304, %v1427
      %v1429 = vand.u32 %v1428, 4294901760
      %1430 = vmatpush1.msra.mxu0 %v1429
      %v1431 = vand.u32 %v307, 4294901760
      %v1432 = vsub.f32 %v307, %v1431
      %v1433 = vand.u32 %v1432, 4294901760
      %1434 = vmatprep.subr.mxu0 %v1433
      %v1435 = vand.u32 %v306, 4294901760
      %v1436 = vsub.f32 %v306, %v1435
      %v1437 = vand.u32 %v1436, 4294901760
      %1438 = vmatpush1.msra.mxu0 %v1437
      %v1439 = vand.u32 %v309, 4294901760
      %v1440 = vsub.f32 %v309, %v1439
      %v1441 = vand.u32 %v1440, 4294901760
      %1442 = vmatprep.subr.mxu0 %v1441
      %v1443 = vand.u32 %v308, 4294901760
      %v1444 = vsub.f32 %v308, %v1443
      %v1445 = vand.u32 %v1444, 4294901760
      %1446 = vmatpush1.msra.mxu0 %v1445
      %v1447 = vand.u32 %v311, 4294901760
      %v1448 = vsub.f32 %v311, %v1447
      %v1449 = vand.u32 %v1448, 4294901760
      %1450 = vmatprep.subr.mxu0 %v1449
      %v1451 = vand.u32 %v310, 4294901760
      %v1452 = vsub.f32 %v310, %v1451
      %v1453 = vand.u32 %v1452, 4294901760
      %1454 = vmatpush1.msra.mxu0 %v1453
      %v1455 = vand.u32 %v313, 4294901760
      %v1456 = vsub.f32 %v313, %v1455
      %v1457 = vand.u32 %v1456, 4294901760
      %1458 = vmatprep.subr.mxu0 %v1457
      %v1459 = vand.u32 %v312, 4294901760
      %v1460 = vsub.f32 %v312, %v1459
      %v1461 = vand.u32 %v1460, 4294901760
      %1462 = vmatpush1.msra.mxu0 %v1461
      %v1463 = vand.u32 %v322, 4294901760
      %1464 = vmatprep.mubr.f32.mxu0 %v1463
      %v1465 = vand.u32 %v321, 4294901760
      %1466 = vmatmul.mubr.f32.gmra.mrb[0].mxu0 %v1465
      %v1467 = vpop.f32.mrb[0].mxu0
      %v1468 = vadd.f32 %v1203, %v1467
      %v1469 = vpop.f32.mrb[0].mxu0
      %v1470 = vadd.f32 %v1205, %v1469
      %1471 = vdwg.mxu0
      %v1472 = vand.u32 %v251, 4294901760
      %1473 = vmatprep.subr.mxu0 %v1472
      %v1474 = vand.u32 %v250, 4294901760
      %1475 = vmatpush1.msra.mxu0 %v1474
      %v1476 = vand.u32 %v253, 4294901760
      %1477 = vmatprep.subr.mxu0 %v1476
      %v1478 = vand.u32 %v252, 4294901760
      %1479 = vmatpush1.msra.mxu0 %v1478
      %v1480 = vand.u32 %v255, 4294901760
      %1481 = vmatprep.subr.mxu0 %v1480
      %v1482 = vand.u32 %v254, 4294901760
      %1483 = vmatpush1.msra.mxu0 %v1482
      %v1484 = vand.u32 %v257, 4294901760
      %1485 = vmatprep.subr.mxu0 %v1484
      %v1486 = vand.u32 %v256, 4294901760
      %1487 = vmatpush1.msra.mxu0 %v1486
      %v1488 = vand.u32 %v259, 4294901760
      %1489 = vmatprep.subr.mxu0 %v1488
      %v1490 = vand.u32 %v258, 4294901760
      %1491 = vmatpush1.msra.mxu0 %v1490
      %v1492 = vand.u32 %v261, 4294901760
      %1493 = vmatprep.subr.mxu0 %v1492
      %v1494 = vand.u32 %v260, 4294901760
      %1495 = vmatpush1.msra.mxu0 %v1494
      %v1496 = vand.u32 %v263, 4294901760
      %1497 = vmatprep.subr.mxu0 %v1496
      %v1498 = vand.u32 %v262, 4294901760
      %1499 = vmatpush1.msra.mxu0 %v1498
      %v1500 = vand.u32 %v265, 4294901760
      %1501 = vmatprep.subr.mxu0 %v1500
      %v1502 = vand.u32 %v264, 4294901760
      %1503 = vmatpush1.msra.mxu0 %v1502
      %v1504 = vand.u32 %v267, 4294901760
      %1505 = vmatprep.subr.mxu0 %v1504
      %v1506 = vand.u32 %v266, 4294901760
      %1507 = vmatpush1.msra.mxu0 %v1506
      %v1508 = vand.u32 %v269, 4294901760
      %1509 = vmatprep.subr.mxu0 %v1508
      %v1510 = vand.u32 %v268, 4294901760
      %1511 = vmatpush1.msra.mxu0 %v1510
      %v1512 = vand.u32 %v271, 4294901760
      %1513 = vmatprep.subr.mxu0 %v1512
      %v1514 = vand.u32 %v270, 4294901760
      %1515 = vmatpush1.msra.mxu0 %v1514
      %v1516 = vand.u32 %v273, 4294901760
      %1517 = vmatprep.subr.mxu0 %v1516
      %v1518 = vand.u32 %v272, 4294901760
      %1519 = vmatpush1.msra.mxu0 %v1518
      %v1520 = vand.u32 %v275, 4294901760
      %1521 = vmatprep.subr.mxu0 %v1520
      %v1522 = vand.u32 %v274, 4294901760
      %1523 = vmatpush1.msra.mxu0 %v1522
      %v1524 = vand.u32 %v277, 4294901760
      %1525 = vmatprep.subr.mxu0 %v1524
      %v1526 = vand.u32 %v276, 4294901760
      %1527 = vmatpush1.msra.mxu0 %v1526
      %v1528 = vand.u32 %v279, 4294901760
      %1529 = vmatprep.subr.mxu0 %v1528
      %v1530 = vand.u32 %v278, 4294901760
      %1531 = vmatpush1.msra.mxu0 %v1530
      %v1532 = vand.u32 %v281, 4294901760
      %1533 = vmatprep.subr.mxu0 %v1532
      %v1534 = vand.u32 %v280, 4294901760
      %1535 = vmatpush1.msra.mxu0 %v1534
      %v1536 = vand.u32 %v283, 4294901760
      %1537 = vmatprep.subr.mxu0 %v1536
      %v1538 = vand.u32 %v282, 4294901760
      %1539 = vmatpush1.msra.mxu0 %v1538
      %v1540 = vand.u32 %v285, 4294901760
      %1541 = vmatprep.subr.mxu0 %v1540
      %v1542 = vand.u32 %v284, 4294901760
      %1543 = vmatpush1.msra.mxu0 %v1542
      %v1544 = vand.u32 %v287, 4294901760
      %1545 = vmatprep.subr.mxu0 %v1544
      %v1546 = vand.u32 %v286, 4294901760
      %1547 = vmatpush1.msra.mxu0 %v1546
      %v1548 = vand.u32 %v289, 4294901760
      %1549 = vmatprep.subr.mxu0 %v1548
      %v1550 = vand.u32 %v288, 4294901760
      %1551 = vmatpush1.msra.mxu0 %v1550
      %v1552 = vand.u32 %v291, 4294901760
      %1553 = vmatprep.subr.mxu0 %v1552
      %v1554 = vand.u32 %v290, 4294901760
      %1555 = vmatpush1.msra.mxu0 %v1554
      %v1556 = vand.u32 %v293, 4294901760
      %1557 = vmatprep.subr.mxu0 %v1556
      %v1558 = vand.u32 %v292, 4294901760
      %1559 = vmatpush1.msra.mxu0 %v1558
      %v1560 = vand.u32 %v295, 4294901760
      %1561 = vmatprep.subr.mxu0 %v1560
      %v1562 = vand.u32 %v294, 4294901760
      %1563 = vmatpush1.msra.mxu0 %v1562
      %v1564 = vand.u32 %v297, 4294901760
      %1565 = vmatprep.subr.mxu0 %v1564
      %v1566 = vand.u32 %v296, 4294901760
      %1567 = vmatpush1.msra.mxu0 %v1566
      %v1568 = vand.u32 %v299, 4294901760
      %1569 = vmatprep.subr.mxu0 %v1568
      %v1570 = vand.u32 %v298, 4294901760
      %1571 = vmatpush1.msra.mxu0 %v1570
      %v1572 = vand.u32 %v301, 4294901760
      %1573 = vmatprep.subr.mxu0 %v1572
      %v1574 = vand.u32 %v300, 4294901760
      %1575 = vmatpush1.msra.mxu0 %v1574
      %v1576 = vand.u32 %v303, 4294901760
      %1577 = vmatprep.subr.mxu0 %v1576
      %v1578 = vand.u32 %v302, 4294901760
      %1579 = vmatpush1.msra.mxu0 %v1578
      %v1580 = vand.u32 %v305, 4294901760
      %1581 = vmatprep.subr.mxu0 %v1580
      %v1582 = vand.u32 %v304, 4294901760
      %1583 = vmatpush1.msra.mxu0 %v1582
      %v1584 = vand.u32 %v307, 4294901760
      %1585 = vmatprep.subr.mxu0 %v1584
      %v1586 = vand.u32 %v306, 4294901760
      %1587 = vmatpush1.msra.mxu0 %v1586
      %v1588 = vand.u32 %v309, 4294901760
      %1589 = vmatprep.subr.mxu0 %v1588
      %v1590 = vand.u32 %v308, 4294901760
      %1591 = vmatpush1.msra.mxu0 %v1590
      %v1592 = vand.u32 %v311, 4294901760
      %1593 = vmatprep.subr.mxu0 %v1592
      %v1594 = vand.u32 %v310, 4294901760
      %1595 = vmatpush1.msra.mxu0 %v1594
      %v1596 = vand.u32 %v313, 4294901760
      %1597 = vmatprep.subr.mxu0 %v1596
      %v1598 = vand.u32 %v312, 4294901760
      %1599 = vmatpush1.msra.mxu0 %v1598
      %v1600 = vand.u32 %v322, 4294901760
      %1601 = vmatprep.mubr.f32.mxu0 %v1600
      %v1602 = vand.u32 %v321, 4294901760
      %1603 = vmatmul.mubr.f32.gmra.mrb[0].mxu0 %v1602
      %v1604 = vpop.f32.mrb[0].mxu0
      %v1605 = vadd.f32 %v1468, %v1604
      %v1606 = vpop.f32.mrb[0].mxu0
      %v1607 = vadd.f32 %v1470, %v1606
      %1608 = vdwg.mxu0
      %v1611 = vunpack.c.l.s4 1983009808
      %v1612 = vunpack.c.0.s8 %v1611
      %v1613 = vlaneseq
      %v1614 = vshrl.u32 %v1613, 7
      %v1615 = vsub.s32 %v1612, %v1614
      %v1616 = vrot.slane %v183, %v1615
      %v1617 = vcombine.high %v1616, %v1616
      %v1620 = vand.u32 %v185, 4294901760
      %1621 = vmatprep.subr.mxu0 %v1620
      %v1622 = vand.u32 %v184, 4294901760
      %1623 = vmatpush1.msra.mxu0 %v1622
      %v1624 = vand.u32 %v187, 4294901760
      %1625 = vmatprep.subr.mxu0 %v1624
      %v1626 = vand.u32 %v186, 4294901760
      %1627 = vmatpush1.msra.mxu0 %v1626
      %v1628 = vand.u32 %v189, 4294901760
      %1629 = vmatprep.subr.mxu0 %v1628
      %v1630 = vand.u32 %v188, 4294901760
      %1631 = vmatpush1.msra.mxu0 %v1630
      %v1632 = vand.u32 %v191, 4294901760
      %1633 = vmatprep.subr.mxu0 %v1632
      %v1634 = vand.u32 %v190, 4294901760
      %1635 = vmatpush1.msra.mxu0 %v1634
      %v1636 = vand.u32 %v193, 4294901760
      %1637 = vmatprep.subr.mxu0 %v1636
      %v1638 = vand.u32 %v192, 4294901760
      %1639 = vmatpush1.msra.mxu0 %v1638
      %v1640 = vand.u32 %v195, 4294901760
      %1641 = vmatprep.subr.mxu0 %v1640
      %v1642 = vand.u32 %v194, 4294901760
      %1643 = vmatpush1.msra.mxu0 %v1642
      %v1644 = vand.u32 %v197, 4294901760
      %1645 = vmatprep.subr.mxu0 %v1644
      %v1646 = vand.u32 %v196, 4294901760
      %1647 = vmatpush1.msra.mxu0 %v1646
      %v1648 = vand.u32 %v199, 4294901760
      %1649 = vmatprep.subr.mxu0 %v1648
      %v1650 = vand.u32 %v198, 4294901760
      %1651 = vmatpush1.msra.mxu0 %v1650
      %v1652 = vand.u32 %v201, 4294901760
      %1653 = vmatprep.subr.mxu0 %v1652
      %v1654 = vand.u32 %v200, 4294901760
      %1655 = vmatpush1.msra.mxu0 %v1654
      %v1656 = vand.u32 %v203, 4294901760
      %1657 = vmatprep.subr.mxu0 %v1656
      %v1658 = vand.u32 %v202, 4294901760
      %1659 = vmatpush1.msra.mxu0 %v1658
      %v1660 = vand.u32 %v205, 4294901760
      %1661 = vmatprep.subr.mxu0 %v1660
      %v1662 = vand.u32 %v204, 4294901760
      %1663 = vmatpush1.msra.mxu0 %v1662
      %v1664 = vand.u32 %v207, 4294901760
      %1665 = vmatprep.subr.mxu0 %v1664
      %v1666 = vand.u32 %v206, 4294901760
      %1667 = vmatpush1.msra.mxu0 %v1666
      %v1668 = vand.u32 %v209, 4294901760
      %1669 = vmatprep.subr.mxu0 %v1668
      %v1670 = vand.u32 %v208, 4294901760
      %1671 = vmatpush1.msra.mxu0 %v1670
      %v1672 = vand.u32 %v211, 4294901760
      %1673 = vmatprep.subr.mxu0 %v1672
      %v1674 = vand.u32 %v210, 4294901760
      %1675 = vmatpush1.msra.mxu0 %v1674
      %v1676 = vand.u32 %v213, 4294901760
      %1677 = vmatprep.subr.mxu0 %v1676
      %v1678 = vand.u32 %v212, 4294901760
      %1679 = vmatpush1.msra.mxu0 %v1678
      %v1680 = vand.u32 %v215, 4294901760
      %1681 = vmatprep.subr.mxu0 %v1680
      %v1682 = vand.u32 %v214, 4294901760
      %1683 = vmatpush1.msra.mxu0 %v1682
      %v1684 = vand.u32 %v217, 4294901760
      %1685 = vmatprep.subr.mxu0 %v1684
      %v1686 = vand.u32 %v216, 4294901760
      %1687 = vmatpush1.msra.mxu0 %v1686
      %v1688 = vand.u32 %v219, 4294901760
      %1689 = vmatprep.subr.mxu0 %v1688
      %v1690 = vand.u32 %v218, 4294901760
      %1691 = vmatpush1.msra.mxu0 %v1690
      %v1692 = vand.u32 %v221, 4294901760
      %1693 = vmatprep.subr.mxu0 %v1692
      %v1694 = vand.u32 %v220, 4294901760
      %1695 = vmatpush1.msra.mxu0 %v1694
      %v1696 = vand.u32 %v223, 4294901760
      %1697 = vmatprep.subr.mxu0 %v1696
      %v1698 = vand.u32 %v222, 4294901760
      %1699 = vmatpush1.msra.mxu0 %v1698
      %v1700 = vand.u32 %v225, 4294901760
      %1701 = vmatprep.subr.mxu0 %v1700
      %v1702 = vand.u32 %v224, 4294901760
      %1703 = vmatpush1.msra.mxu0 %v1702
      %v1704 = vand.u32 %v227, 4294901760
      %1705 = vmatprep.subr.mxu0 %v1704
      %v1706 = vand.u32 %v226, 4294901760
      %1707 = vmatpush1.msra.mxu0 %v1706
      %v1708 = vand.u32 %v229, 4294901760
      %1709 = vmatprep.subr.mxu0 %v1708
      %v1710 = vand.u32 %v228, 4294901760
      %1711 = vmatpush1.msra.mxu0 %v1710
      %v1712 = vand.u32 %v231, 4294901760
      %1713 = vmatprep.subr.mxu0 %v1712
      %v1714 = vand.u32 %v230, 4294901760
      %1715 = vmatpush1.msra.mxu0 %v1714
      %v1716 = vand.u32 %v233, 4294901760
      %1717 = vmatprep.subr.mxu0 %v1716
      %v1718 = vand.u32 %v232, 4294901760
      %1719 = vmatpush1.msra.mxu0 %v1718
      %v1720 = vand.u32 %v235, 4294901760
      %1721 = vmatprep.subr.mxu0 %v1720
      %v1722 = vand.u32 %v234, 4294901760
      %1723 = vmatpush1.msra.mxu0 %v1722
      %v1724 = vand.u32 %v237, 4294901760
      %1725 = vmatprep.subr.mxu0 %v1724
      %v1726 = vand.u32 %v236, 4294901760
      %1727 = vmatpush1.msra.mxu0 %v1726
      %v1728 = vand.u32 %v239, 4294901760
      %1729 = vmatprep.subr.mxu0 %v1728
      %v1730 = vand.u32 %v238, 4294901760
      %1731 = vmatpush1.msra.mxu0 %v1730
      %v1732 = vand.u32 %v241, 4294901760
      %1733 = vmatprep.subr.mxu0 %v1732
      %v1734 = vand.u32 %v240, 4294901760
      %1735 = vmatpush1.msra.mxu0 %v1734
      %v1736 = vand.u32 %v243, 4294901760
      %1737 = vmatprep.subr.mxu0 %v1736
      %v1738 = vand.u32 %v242, 4294901760
      %1739 = vmatpush1.msra.mxu0 %v1738
      %v1740 = vand.u32 %v245, 4294901760
      %1741 = vmatprep.subr.mxu0 %v1740
      %v1742 = vand.u32 %v244, 4294901760
      %1743 = vmatpush1.msra.mxu0 %v1742
      %v1744 = vand.u32 %v247, 4294901760
      %1745 = vmatprep.subr.mxu0 %v1744
      %v1746 = vand.u32 %v246, 4294901760
      %1747 = vmatpush1.msra.mxu0 %v1746
      %v1748 = vand.u32 %v1617, 4294901760
      %v1749 = vsub.f32 %v1617, %v1748
      %v1750 = vand.u32 %v1749, 4294901760
      %v1751 = vsub.f32 %v1749, %v1750
      %v1752 = vand.u32 %v1751, 4294901760
      %1753 = vmatprep.mubr.f32.mxu0 %v1752
      %v1754 = vand.u32 %v1616, 4294901760
      %v1755 = vsub.f32 %v1616, %v1754
      %v1756 = vand.u32 %v1755, 4294901760
      %v1757 = vsub.f32 %v1755, %v1756
      %v1758 = vand.u32 %v1757, 4294901760
      %1759 = vmatmul.mubr.f32.gmra.mrb[0].mxu0 %v1758
      %v1760 = vpop.f32.mrb[0].mxu0
      %v1761 = vadd.f32 %v1605, %v1760
      %v1762 = vpop.f32.mrb[0].mxu0
      %v1763 = vadd.f32 %v1607, %v1762
      %1764 = vdwg.mxu0
      %v1765 = vand.u32 %v185, 4294901760
      %v1766 = vsub.f32 %v185, %v1765
      %v1767 = vand.u32 %v1766, 4294901760
      %v1768 = vsub.f32 %v1766, %v1767
      %v1769 = vand.u32 %v1768, 4294901760
      %1770 = vmatprep.subr.mxu0 %v1769
      %v1771 = vand.u32 %v184, 4294901760
      %v1772 = vsub.f32 %v184, %v1771
      %v1773 = vand.u32 %v1772, 4294901760
      %v1774 = vsub.f32 %v1772, %v1773
      %v1775 = vand.u32 %v1774, 4294901760
      %1776 = vmatpush1.msra.mxu0 %v1775
      %v1777 = vand.u32 %v187, 4294901760
      %v1778 = vsub.f32 %v187, %v1777
      %v1779 = vand.u32 %v1778, 4294901760
      %v1780 = vsub.f32 %v1778, %v1779
      %v1781 = vand.u32 %v1780, 4294901760
      %1782 = vmatprep.subr.mxu0 %v1781
      %v1783 = vand.u32 %v186, 4294901760
      %v1784 = vsub.f32 %v186, %v1783
      %v1785 = vand.u32 %v1784, 4294901760
      %v1786 = vsub.f32 %v1784, %v1785
      %v1787 = vand.u32 %v1786, 4294901760
      %1788 = vmatpush1.msra.mxu0 %v1787
      %v1789 = vand.u32 %v189, 4294901760
      %v1790 = vsub.f32 %v189, %v1789
      %v1791 = vand.u32 %v1790, 4294901760
      %v1792 = vsub.f32 %v1790, %v1791
      %v1793 = vand.u32 %v1792, 4294901760
      %1794 = vmatprep.subr.mxu0 %v1793
      %v1795 = vand.u32 %v188, 4294901760
      %v1796 = vsub.f32 %v188, %v1795
      %v1797 = vand.u32 %v1796, 4294901760
      %v1798 = vsub.f32 %v1796, %v1797
      %v1799 = vand.u32 %v1798, 4294901760
      %1800 = vmatpush1.msra.mxu0 %v1799
      %v1801 = vand.u32 %v191, 4294901760
      %v1802 = vsub.f32 %v191, %v1801
      %v1803 = vand.u32 %v1802, 4294901760
      %v1804 = vsub.f32 %v1802, %v1803
      %v1805 = vand.u32 %v1804, 4294901760
      %1806 = vmatprep.subr.mxu0 %v1805
      %v1807 = vand.u32 %v190, 4294901760
      %v1808 = vsub.f32 %v190, %v1807
      %v1809 = vand.u32 %v1808, 4294901760
      %v1810 = vsub.f32 %v1808, %v1809
      %v1811 = vand.u32 %v1810, 4294901760
      %1812 = vmatpush1.msra.mxu0 %v1811
      %v1813 = vand.u32 %v193, 4294901760
      %v1814 = vsub.f32 %v193, %v1813
      %v1815 = vand.u32 %v1814, 4294901760
      %v1816 = vsub.f32 %v1814, %v1815
      %v1817 = vand.u32 %v1816, 4294901760
      %1818 = vmatprep.subr.mxu0 %v1817
      %v1819 = vand.u32 %v192, 4294901760
      %v1820 = vsub.f32 %v192, %v1819
      %v1821 = vand.u32 %v1820, 4294901760
      %v1822 = vsub.f32 %v1820, %v1821
      %v1823 = vand.u32 %v1822, 4294901760
      %1824 = vmatpush1.msra.mxu0 %v1823
      %v1825 = vand.u32 %v195, 4294901760
      %v1826 = vsub.f32 %v195, %v1825
      %v1827 = vand.u32 %v1826, 4294901760
      %v1828 = vsub.f32 %v1826, %v1827
      %v1829 = vand.u32 %v1828, 4294901760
      %1830 = vmatprep.subr.mxu0 %v1829
      %v1831 = vand.u32 %v194, 4294901760
      %v1832 = vsub.f32 %v194, %v1831
      %v1833 = vand.u32 %v1832, 4294901760
      %v1834 = vsub.f32 %v1832, %v1833
      %v1835 = vand.u32 %v1834, 4294901760
      %1836 = vmatpush1.msra.mxu0 %v1835
      %v1837 = vand.u32 %v197, 4294901760
      %v1838 = vsub.f32 %v197, %v1837
      %v1839 = vand.u32 %v1838, 4294901760
      %v1840 = vsub.f32 %v1838, %v1839
      %v1841 = vand.u32 %v1840, 4294901760
      %1842 = vmatprep.subr.mxu0 %v1841
      %v1843 = vand.u32 %v196, 4294901760
      %v1844 = vsub.f32 %v196, %v1843
      %v1845 = vand.u32 %v1844, 4294901760
      %v1846 = vsub.f32 %v1844, %v1845
      %v1847 = vand.u32 %v1846, 4294901760
      %1848 = vmatpush1.msra.mxu0 %v1847
      %v1849 = vand.u32 %v199, 4294901760
      %v1850 = vsub.f32 %v199, %v1849
      %v1851 = vand.u32 %v1850, 4294901760
      %v1852 = vsub.f32 %v1850, %v1851
      %v1853 = vand.u32 %v1852, 4294901760
      %1854 = vmatprep.subr.mxu0 %v1853
      %v1855 = vand.u32 %v198, 4294901760
      %v1856 = vsub.f32 %v198, %v1855
      %v1857 = vand.u32 %v1856, 4294901760
      %v1858 = vsub.f32 %v1856, %v1857
      %v1859 = vand.u32 %v1858, 4294901760
      %1860 = vmatpush1.msra.mxu0 %v1859
      %v1861 = vand.u32 %v201, 4294901760
      %v1862 = vsub.f32 %v201, %v1861
      %v1863 = vand.u32 %v1862, 4294901760
      %v1864 = vsub.f32 %v1862, %v1863
      %v1865 = vand.u32 %v1864, 4294901760
      %1866 = vmatprep.subr.mxu0 %v1865
      %v1867 = vand.u32 %v200, 4294901760
      %v1868 = vsub.f32 %v200, %v1867
      %v1869 = vand.u32 %v1868, 4294901760
      %v1870 = vsub.f32 %v1868, %v1869
      %v1871 = vand.u32 %v1870, 4294901760
      %1872 = vmatpush1.msra.mxu0 %v1871
      %v1873 = vand.u32 %v203, 4294901760
      %v1874 = vsub.f32 %v203, %v1873
      %v1875 = vand.u32 %v1874, 4294901760
      %v1876 = vsub.f32 %v1874, %v1875
      %v1877 = vand.u32 %v1876, 4294901760
      %1878 = vmatprep.subr.mxu0 %v1877
      %v1879 = vand.u32 %v202, 4294901760
      %v1880 = vsub.f32 %v202, %v1879
      %v1881 = vand.u32 %v1880, 4294901760
      %v1882 = vsub.f32 %v1880, %v1881
      %v1883 = vand.u32 %v1882, 4294901760
      %1884 = vmatpush1.msra.mxu0 %v1883
      %v1885 = vand.u32 %v205, 4294901760
      %v1886 = vsub.f32 %v205, %v1885
      %v1887 = vand.u32 %v1886, 4294901760
      %v1888 = vsub.f32 %v1886, %v1887
      %v1889 = vand.u32 %v1888, 4294901760
      %1890 = vmatprep.subr.mxu0 %v1889
      %v1891 = vand.u32 %v204, 4294901760
      %v1892 = vsub.f32 %v204, %v1891
      %v1893 = vand.u32 %v1892, 4294901760
      %v1894 = vsub.f32 %v1892, %v1893
      %v1895 = vand.u32 %v1894, 4294901760
      %1896 = vmatpush1.msra.mxu0 %v1895
      %v1897 = vand.u32 %v207, 4294901760
      %v1898 = vsub.f32 %v207, %v1897
      %v1899 = vand.u32 %v1898, 4294901760
      %v1900 = vsub.f32 %v1898, %v1899
      %v1901 = vand.u32 %v1900, 4294901760
      %1902 = vmatprep.subr.mxu0 %v1901
      %v1903 = vand.u32 %v206, 4294901760
      %v1904 = vsub.f32 %v206, %v1903
      %v1905 = vand.u32 %v1904, 4294901760
      %v1906 = vsub.f32 %v1904, %v1905
      %v1907 = vand.u32 %v1906, 4294901760
      %1908 = vmatpush1.msra.mxu0 %v1907
      %v1909 = vand.u32 %v209, 4294901760
      %v1910 = vsub.f32 %v209, %v1909
      %v1911 = vand.u32 %v1910, 4294901760
      %v1912 = vsub.f32 %v1910, %v1911
      %v1913 = vand.u32 %v1912, 4294901760
      %1914 = vmatprep.subr.mxu0 %v1913
      %v1915 = vand.u32 %v208, 4294901760
      %v1916 = vsub.f32 %v208, %v1915
      %v1917 = vand.u32 %v1916, 4294901760
      %v1918 = vsub.f32 %v1916, %v1917
      %v1919 = vand.u32 %v1918, 4294901760
      %1920 = vmatpush1.msra.mxu0 %v1919
      %v1921 = vand.u32 %v211, 4294901760
      %v1922 = vsub.f32 %v211, %v1921
      %v1923 = vand.u32 %v1922, 4294901760
      %v1924 = vsub.f32 %v1922, %v1923
      %v1925 = vand.u32 %v1924, 4294901760
      %1926 = vmatprep.subr.mxu0 %v1925
      %v1927 = vand.u32 %v210, 4294901760
      %v1928 = vsub.f32 %v210, %v1927
      %v1929 = vand.u32 %v1928, 4294901760
      %v1930 = vsub.f32 %v1928, %v1929
      %v1931 = vand.u32 %v1930, 4294901760
      %1932 = vmatpush1.msra.mxu0 %v1931
      %v1933 = vand.u32 %v213, 4294901760
      %v1934 = vsub.f32 %v213, %v1933
      %v1935 = vand.u32 %v1934, 4294901760
      %v1936 = vsub.f32 %v1934, %v1935
      %v1937 = vand.u32 %v1936, 4294901760
      %1938 = vmatprep.subr.mxu0 %v1937
      %v1939 = vand.u32 %v212, 4294901760
      %v1940 = vsub.f32 %v212, %v1939
      %v1941 = vand.u32 %v1940, 4294901760
      %v1942 = vsub.f32 %v1940, %v1941
      %v1943 = vand.u32 %v1942, 4294901760
      %1944 = vmatpush1.msra.mxu0 %v1943
      %v1945 = vand.u32 %v215, 4294901760
      %v1946 = vsub.f32 %v215, %v1945
      %v1947 = vand.u32 %v1946, 4294901760
      %v1948 = vsub.f32 %v1946, %v1947
      %v1949 = vand.u32 %v1948, 4294901760
      %1950 = vmatprep.subr.mxu0 %v1949
      %v1951 = vand.u32 %v214, 4294901760
      %v1952 = vsub.f32 %v214, %v1951
      %v1953 = vand.u32 %v1952, 4294901760
      %v1954 = vsub.f32 %v1952, %v1953
      %v1955 = vand.u32 %v1954, 4294901760
      %1956 = vmatpush1.msra.mxu0 %v1955
      %v1957 = vand.u32 %v217, 4294901760
      %v1958 = vsub.f32 %v217, %v1957
      %v1959 = vand.u32 %v1958, 4294901760
      %v1960 = vsub.f32 %v1958, %v1959
      %v1961 = vand.u32 %v1960, 4294901760
      %1962 = vmatprep.subr.mxu0 %v1961
      %v1963 = vand.u32 %v216, 4294901760
      %v1964 = vsub.f32 %v216, %v1963
      %v1965 = vand.u32 %v1964, 4294901760
      %v1966 = vsub.f32 %v1964, %v1965
      %v1967 = vand.u32 %v1966, 4294901760
      %1968 = vmatpush1.msra.mxu0 %v1967
      %v1969 = vand.u32 %v219, 4294901760
      %v1970 = vsub.f32 %v219, %v1969
      %v1971 = vand.u32 %v1970, 4294901760
      %v1972 = vsub.f32 %v1970, %v1971
      %v1973 = vand.u32 %v1972, 4294901760
      %1974 = vmatprep.subr.mxu0 %v1973
      %v1975 = vand.u32 %v218, 4294901760
      %v1976 = vsub.f32 %v218, %v1975
      %v1977 = vand.u32 %v1976, 4294901760
      %v1978 = vsub.f32 %v1976, %v1977
      %v1979 = vand.u32 %v1978, 4294901760
      %1980 = vmatpush1.msra.mxu0 %v1979
      %v1981 = vand.u32 %v221, 4294901760
      %v1982 = vsub.f32 %v221, %v1981
      %v1983 = vand.u32 %v1982, 4294901760
      %v1984 = vsub.f32 %v1982, %v1983
      %v1985 = vand.u32 %v1984, 4294901760
      %1986 = vmatprep.subr.mxu0 %v1985
      %v1987 = vand.u32 %v220, 4294901760
      %v1988 = vsub.f32 %v220, %v1987
      %v1989 = vand.u32 %v1988, 4294901760
      %v1990 = vsub.f32 %v1988, %v1989
      %v1991 = vand.u32 %v1990, 4294901760
      %1992 = vmatpush1.msra.mxu0 %v1991
      %v1993 = vand.u32 %v223, 4294901760
      %v1994 = vsub.f32 %v223, %v1993
      %v1995 = vand.u32 %v1994, 4294901760
      %v1996 = vsub.f32 %v1994, %v1995
      %v1997 = vand.u32 %v1996, 4294901760
      %1998 = vmatprep.subr.mxu0 %v1997
      %v1999 = vand.u32 %v222, 4294901760
      %v2000 = vsub.f32 %v222, %v1999
      %v2001 = vand.u32 %v2000, 4294901760
      %v2002 = vsub.f32 %v2000, %v2001
      %v2003 = vand.u32 %v2002, 4294901760
      %2004 = vmatpush1.msra.mxu0 %v2003
      %v2005 = vand.u32 %v225, 4294901760
      %v2006 = vsub.f32 %v225, %v2005
      %v2007 = vand.u32 %v2006, 4294901760
      %v2008 = vsub.f32 %v2006, %v2007
      %v2009 = vand.u32 %v2008, 4294901760
      %2010 = vmatprep.subr.mxu0 %v2009
      %v2011 = vand.u32 %v224, 4294901760
      %v2012 = vsub.f32 %v224, %v2011
      %v2013 = vand.u32 %v2012, 4294901760
      %v2014 = vsub.f32 %v2012, %v2013
      %v2015 = vand.u32 %v2014, 4294901760
      %2016 = vmatpush1.msra.mxu0 %v2015
      %v2017 = vand.u32 %v227, 4294901760
      %v2018 = vsub.f32 %v227, %v2017
      %v2019 = vand.u32 %v2018, 4294901760
      %v2020 = vsub.f32 %v2018, %v2019
      %v2021 = vand.u32 %v2020, 4294901760
      %2022 = vmatprep.subr.mxu0 %v2021
      %v2023 = vand.u32 %v226, 4294901760
      %v2024 = vsub.f32 %v226, %v2023
      %v2025 = vand.u32 %v2024, 4294901760
      %v2026 = vsub.f32 %v2024, %v2025
      %v2027 = vand.u32 %v2026, 4294901760
      %2028 = vmatpush1.msra.mxu0 %v2027
      %v2029 = vand.u32 %v229, 4294901760
      %v2030 = vsub.f32 %v229, %v2029
      %v2031 = vand.u32 %v2030, 4294901760
      %v2032 = vsub.f32 %v2030, %v2031
      %v2033 = vand.u32 %v2032, 4294901760
      %2034 = vmatprep.subr.mxu0 %v2033
      %v2035 = vand.u32 %v228, 4294901760
      %v2036 = vsub.f32 %v228, %v2035
      %v2037 = vand.u32 %v2036, 4294901760
      %v2038 = vsub.f32 %v2036, %v2037
      %v2039 = vand.u32 %v2038, 4294901760
      %2040 = vmatpush1.msra.mxu0 %v2039
      %v2041 = vand.u32 %v231, 4294901760
      %v2042 = vsub.f32 %v231, %v2041
      %v2043 = vand.u32 %v2042, 4294901760
      %v2044 = vsub.f32 %v2042, %v2043
      %v2045 = vand.u32 %v2044, 4294901760
      %2046 = vmatprep.subr.mxu0 %v2045
      %v2047 = vand.u32 %v230, 4294901760
      %v2048 = vsub.f32 %v230, %v2047
      %v2049 = vand.u32 %v2048, 4294901760
      %v2050 = vsub.f32 %v2048, %v2049
      %v2051 = vand.u32 %v2050, 4294901760
      %2052 = vmatpush1.msra.mxu0 %v2051
      %v2053 = vand.u32 %v233, 4294901760
      %v2054 = vsub.f32 %v233, %v2053
      %v2055 = vand.u32 %v2054, 4294901760
      %v2056 = vsub.f32 %v2054, %v2055
      %v2057 = vand.u32 %v2056, 4294901760
      %2058 = vmatprep.subr.mxu0 %v2057
      %v2059 = vand.u32 %v232, 4294901760
      %v2060 = vsub.f32 %v232, %v2059
      %v2061 = vand.u32 %v2060, 4294901760
      %v2062 = vsub.f32 %v2060, %v2061
      %v2063 = vand.u32 %v2062, 4294901760
      %2064 = vmatpush1.msra.mxu0 %v2063
      %v2065 = vand.u32 %v235, 4294901760
      %v2066 = vsub.f32 %v235, %v2065
      %v2067 = vand.u32 %v2066, 4294901760
      %v2068 = vsub.f32 %v2066, %v2067
      %v2069 = vand.u32 %v2068, 4294901760
      %2070 = vmatprep.subr.mxu0 %v2069
      %v2071 = vand.u32 %v234, 4294901760
      %v2072 = vsub.f32 %v234, %v2071
      %v2073 = vand.u32 %v2072, 4294901760
      %v2074 = vsub.f32 %v2072, %v2073
      %v2075 = vand.u32 %v2074, 4294901760
      %2076 = vmatpush1.msra.mxu0 %v2075
      %v2077 = vand.u32 %v237, 4294901760
      %v2078 = vsub.f32 %v237, %v2077
      %v2079 = vand.u32 %v2078, 4294901760
      %v2080 = vsub.f32 %v2078, %v2079
      %v2081 = vand.u32 %v2080, 4294901760
      %2082 = vmatprep.subr.mxu0 %v2081
      %v2083 = vand.u32 %v236, 4294901760
      %v2084 = vsub.f32 %v236, %v2083
      %v2085 = vand.u32 %v2084, 4294901760
      %v2086 = vsub.f32 %v2084, %v2085
      %v2087 = vand.u32 %v2086, 4294901760
      %2088 = vmatpush1.msra.mxu0 %v2087
      %v2089 = vand.u32 %v239, 4294901760
      %v2090 = vsub.f32 %v239, %v2089
      %v2091 = vand.u32 %v2090, 4294901760
      %v2092 = vsub.f32 %v2090, %v2091
      %v2093 = vand.u32 %v2092, 4294901760
      %2094 = vmatprep.subr.mxu0 %v2093
      %v2095 = vand.u32 %v238, 4294901760
      %v2096 = vsub.f32 %v238, %v2095
      %v2097 = vand.u32 %v2096, 4294901760
      %v2098 = vsub.f32 %v2096, %v2097
      %v2099 = vand.u32 %v2098, 4294901760
      %2100 = vmatpush1.msra.mxu0 %v2099
      %v2101 = vand.u32 %v241, 4294901760
      %v2102 = vsub.f32 %v241, %v2101
      %v2103 = vand.u32 %v2102, 4294901760
      %v2104 = vsub.f32 %v2102, %v2103
      %v2105 = vand.u32 %v2104, 4294901760
      %2106 = vmatprep.subr.mxu0 %v2105
      %v2107 = vand.u32 %v240, 4294901760
      %v2108 = vsub.f32 %v240, %v2107
      %v2109 = vand.u32 %v2108, 4294901760
      %v2110 = vsub.f32 %v2108, %v2109
      %v2111 = vand.u32 %v2110, 4294901760
      %2112 = vmatpush1.msra.mxu0 %v2111
      %v2113 = vand.u32 %v243, 4294901760
      %v2114 = vsub.f32 %v243, %v2113
      %v2115 = vand.u32 %v2114, 4294901760
      %v2116 = vsub.f32 %v2114, %v2115
      %v2117 = vand.u32 %v2116, 4294901760
      %2118 = vmatprep.subr.mxu0 %v2117
      %v2119 = vand.u32 %v242, 4294901760
      %v2120 = vsub.f32 %v242, %v2119
      %v2121 = vand.u32 %v2120, 4294901760
      %v2122 = vsub.f32 %v2120, %v2121
      %v2123 = vand.u32 %v2122, 4294901760
      %2124 = vmatpush1.msra.mxu0 %v2123
      %v2125 = vand.u32 %v245, 4294901760
      %v2126 = vsub.f32 %v245, %v2125
      %v2127 = vand.u32 %v2126, 4294901760
      %v2128 = vsub.f32 %v2126, %v2127
      %v2129 = vand.u32 %v2128, 4294901760
      %2130 = vmatprep.subr.mxu0 %v2129
      %v2131 = vand.u32 %v244, 4294901760
      %v2132 = vsub.f32 %v244, %v2131
      %v2133 = vand.u32 %v2132, 4294901760
      %v2134 = vsub.f32 %v2132, %v2133
      %v2135 = vand.u32 %v2134, 4294901760
      %2136 = vmatpush1.msra.mxu0 %v2135
      %v2137 = vand.u32 %v247, 4294901760
      %v2138 = vsub.f32 %v247, %v2137
      %v2139 = vand.u32 %v2138, 4294901760
      %v2140 = vsub.f32 %v2138, %v2139
      %v2141 = vand.u32 %v2140, 4294901760
      %2142 = vmatprep.subr.mxu0 %v2141
      %v2143 = vand.u32 %v246, 4294901760
      %v2144 = vsub.f32 %v246, %v2143
      %v2145 = vand.u32 %v2144, 4294901760
      %v2146 = vsub.f32 %v2144, %v2145
      %v2147 = vand.u32 %v2146, 4294901760
      %2148 = vmatpush1.msra.mxu0 %v2147
      %v2149 = vand.u32 %v1617, 4294901760
      %2150 = vmatprep.mubr.f32.mxu0 %v2149
      %v2151 = vand.u32 %v1616, 4294901760
      %2152 = vmatmul.mubr.f32.gmra.mrb[0].mxu0 %v2151
      %v2153 = vpop.f32.mrb[0].mxu0
      %v2154 = vadd.f32 %v1761, %v2153
      %v2155 = vpop.f32.mrb[0].mxu0
      %v2156 = vadd.f32 %v1763, %v2155
      %2157 = vdwg.mxu0
      %v2158 = vand.u32 %v185, 4294901760
      %v2159 = vsub.f32 %v185, %v2158
      %2160 = vmatprep.subr.mxu0 %v2159
      %v2161 = vand.u32 %v184, 4294901760
      %v2162 = vsub.f32 %v184, %v2161
      %2163 = vmatpush1.msra.mxu0 %v2162
      %v2164 = vand.u32 %v187, 4294901760
      %v2165 = vsub.f32 %v187, %v2164
      %2166 = vmatprep.subr.mxu0 %v2165
      %v2167 = vand.u32 %v186, 4294901760
      %v2168 = vsub.f32 %v186, %v2167
      %2169 = vmatpush1.msra.mxu0 %v2168
      %v2170 = vand.u32 %v189, 4294901760
      %v2171 = vsub.f32 %v189, %v2170
      %2172 = vmatprep.subr.mxu0 %v2171
      %v2173 = vand.u32 %v188, 4294901760
      %v2174 = vsub.f32 %v188, %v2173
      %2175 = vmatpush1.msra.mxu0 %v2174
      %v2176 = vand.u32 %v191, 4294901760
      %v2177 = vsub.f32 %v191, %v2176
      %2178 = vmatprep.subr.mxu0 %v2177
      %v2179 = vand.u32 %v190, 4294901760
      %v2180 = vsub.f32 %v190, %v2179
      %2181 = vmatpush1.msra.mxu0 %v2180
      %v2182 = vand.u32 %v193, 4294901760
      %v2183 = vsub.f32 %v193, %v2182
      %2184 = vmatprep.subr.mxu0 %v2183
      %v2185 = vand.u32 %v192, 4294901760
      %v2186 = vsub.f32 %v192, %v2185
      %2187 = vmatpush1.msra.mxu0 %v2186
      %v2188 = vand.u32 %v195, 4294901760
      %v2189 = vsub.f32 %v195, %v2188
      %2190 = vmatprep.subr.mxu0 %v2189
      %v2191 = vand.u32 %v194, 4294901760
      %v2192 = vsub.f32 %v194, %v2191
      %2193 = vmatpush1.msra.mxu0 %v2192
      %v2194 = vand.u32 %v197, 4294901760
      %v2195 = vsub.f32 %v197, %v2194
      %2196 = vmatprep.subr.mxu0 %v2195
      %v2197 = vand.u32 %v196, 4294901760
      %v2198 = vsub.f32 %v196, %v2197
      %2199 = vmatpush1.msra.mxu0 %v2198
      %v2200 = vand.u32 %v199, 4294901760
      %v2201 = vsub.f32 %v199, %v2200
      %2202 = vmatprep.subr.mxu0 %v2201
      %v2203 = vand.u32 %v198, 4294901760
      %v2204 = vsub.f32 %v198, %v2203
      %2205 = vmatpush1.msra.mxu0 %v2204
      %v2206 = vand.u32 %v201, 4294901760
      %v2207 = vsub.f32 %v201, %v2206
      %2208 = vmatprep.subr.mxu0 %v2207
      %v2209 = vand.u32 %v200, 4294901760
      %v2210 = vsub.f32 %v200, %v2209
      %2211 = vmatpush1.msra.mxu0 %v2210
      %v2212 = vand.u32 %v203, 4294901760
      %v2213 = vsub.f32 %v203, %v2212
      %2214 = vmatprep.subr.mxu0 %v2213
      %v2215 = vand.u32 %v202, 4294901760
      %v2216 = vsub.f32 %v202, %v2215
      %2217 = vmatpush1.msra.mxu0 %v2216
      %v2218 = vand.u32 %v205, 4294901760
      %v2219 = vsub.f32 %v205, %v2218
      %2220 = vmatprep.subr.mxu0 %v2219
      %v2221 = vand.u32 %v204, 4294901760
      %v2222 = vsub.f32 %v204, %v2221
      %2223 = vmatpush1.msra.mxu0 %v2222
      %v2224 = vand.u32 %v207, 4294901760
      %v2225 = vsub.f32 %v207, %v2224
      %2226 = vmatprep.subr.mxu0 %v2225
      %v2227 = vand.u32 %v206, 4294901760
      %v2228 = vsub.f32 %v206, %v2227
      %2229 = vmatpush1.msra.mxu0 %v2228
      %v2230 = vand.u32 %v209, 4294901760
      %v2231 = vsub.f32 %v209, %v2230
      %2232 = vmatprep.subr.mxu0 %v2231
      %v2233 = vand.u32 %v208, 4294901760
      %v2234 = vsub.f32 %v208, %v2233
      %2235 = vmatpush1.msra.mxu0 %v2234
      %v2236 = vand.u32 %v211, 4294901760
      %v2237 = vsub.f32 %v211, %v2236
      %2238 = vmatprep.subr.mxu0 %v2237
      %v2239 = vand.u32 %v210, 4294901760
      %v2240 = vsub.f32 %v210, %v2239
      %2241 = vmatpush1.msra.mxu0 %v2240
      %v2242 = vand.u32 %v213, 4294901760
      %v2243 = vsub.f32 %v213, %v2242
      %2244 = vmatprep.subr.mxu0 %v2243
      %v2245 = vand.u32 %v212, 4294901760
      %v2246 = vsub.f32 %v212, %v2245
      %2247 = vmatpush1.msra.mxu0 %v2246
      %v2248 = vand.u32 %v215, 4294901760
      %v2249 = vsub.f32 %v215, %v2248
      %2250 = vmatprep.subr.mxu0 %v2249
      %v2251 = vand.u32 %v214, 4294901760
      %v2252 = vsub.f32 %v214, %v2251
      %2253 = vmatpush1.msra.mxu0 %v2252
      %v2254 = vand.u32 %v217, 4294901760
      %v2255 = vsub.f32 %v217, %v2254
      %2256 = vmatprep.subr.mxu0 %v2255
      %v2257 = vand.u32 %v216, 4294901760
      %v2258 = vsub.f32 %v216, %v2257
      %2259 = vmatpush1.msra.mxu0 %v2258
      %v2260 = vand.u32 %v219, 4294901760
      %v2261 = vsub.f32 %v219, %v2260
      %2262 = vmatprep.subr.mxu0 %v2261
      %v2263 = vand.u32 %v218, 4294901760
      %v2264 = vsub.f32 %v218, %v2263
      %2265 = vmatpush1.msra.mxu0 %v2264
      %v2266 = vand.u32 %v221, 4294901760
      %v2267 = vsub.f32 %v221, %v2266
      %2268 = vmatprep.subr.mxu0 %v2267
      %v2269 = vand.u32 %v220, 4294901760
      %v2270 = vsub.f32 %v220, %v2269
      %2271 = vmatpush1.msra.mxu0 %v2270
      %v2272 = vand.u32 %v223, 4294901760
      %v2273 = vsub.f32 %v223, %v2272
      %2274 = vmatprep.subr.mxu0 %v2273
      %v2275 = vand.u32 %v222, 4294901760
      %v2276 = vsub.f32 %v222, %v2275
      %2277 = vmatpush1.msra.mxu0 %v2276
      %v2278 = vand.u32 %v225, 4294901760
      %v2279 = vsub.f32 %v225, %v2278
      %2280 = vmatprep.subr.mxu0 %v2279
      %v2281 = vand.u32 %v224, 4294901760
      %v2282 = vsub.f32 %v224, %v2281
      %2283 = vmatpush1.msra.mxu0 %v2282
      %v2284 = vand.u32 %v227, 4294901760
      %v2285 = vsub.f32 %v227, %v2284
      %2286 = vmatprep.subr.mxu0 %v2285
      %v2287 = vand.u32 %v226, 4294901760
      %v2288 = vsub.f32 %v226, %v2287
      %2289 = vmatpush1.msra.mxu0 %v2288
      %v2290 = vand.u32 %v229, 4294901760
      %v2291 = vsub.f32 %v229, %v2290
      %2292 = vmatprep.subr.mxu0 %v2291
      %v2293 = vand.u32 %v228, 4294901760
      %v2294 = vsub.f32 %v228, %v2293
      %2295 = vmatpush1.msra.mxu0 %v2294
      %v2296 = vand.u32 %v231, 4294901760
      %v2297 = vsub.f32 %v231, %v2296
      %2298 = vmatprep.subr.mxu0 %v2297
      %v2299 = vand.u32 %v230, 4294901760
      %v2300 = vsub.f32 %v230, %v2299
      %2301 = vmatpush1.msra.mxu0 %v2300
      %v2302 = vand.u32 %v233, 4294901760
      %v2303 = vsub.f32 %v233, %v2302
      %2304 = vmatprep.subr.mxu0 %v2303
      %v2305 = vand.u32 %v232, 4294901760
      %v2306 = vsub.f32 %v232, %v2305
      %2307 = vmatpush1.msra.mxu0 %v2306
      %v2308 = vand.u32 %v235, 4294901760
      %v2309 = vsub.f32 %v235, %v2308
      %2310 = vmatprep.subr.mxu0 %v2309
      %v2311 = vand.u32 %v234, 4294901760
      %v2312 = vsub.f32 %v234, %v2311
      %2313 = vmatpush1.msra.mxu0 %v2312
      %v2314 = vand.u32 %v237, 4294901760
      %v2315 = vsub.f32 %v237, %v2314
      %2316 = vmatprep.subr.mxu0 %v2315
      %v2317 = vand.u32 %v236, 4294901760
      %v2318 = vsub.f32 %v236, %v2317
      %2319 = vmatpush1.msra.mxu0 %v2318
      %v2320 = vand.u32 %v239, 4294901760
      %v2321 = vsub.f32 %v239, %v2320
      %2322 = vmatprep.subr.mxu0 %v2321
      %v2323 = vand.u32 %v238, 4294901760
      %v2324 = vsub.f32 %v238, %v2323
      %2325 = vmatpush1.msra.mxu0 %v2324
      %v2326 = vand.u32 %v241, 4294901760
      %v2327 = vsub.f32 %v241, %v2326
      %2328 = vmatprep.subr.mxu0 %v2327
      %v2329 = vand.u32 %v240, 4294901760
      %v2330 = vsub.f32 %v240, %v2329
      %2331 = vmatpush1.msra.mxu0 %v2330
      %v2332 = vand.u32 %v243, 4294901760
      %v2333 = vsub.f32 %v243, %v2332
      %2334 = vmatprep.subr.mxu0 %v2333
      %v2335 = vand.u32 %v242, 4294901760
      %v2336 = vsub.f32 %v242, %v2335
      %2337 = vmatpush1.msra.mxu0 %v2336
      %v2338 = vand.u32 %v245, 4294901760
      %v2339 = vsub.f32 %v245, %v2338
      %2340 = vmatprep.subr.mxu0 %v2339
      %v2341 = vand.u32 %v244, 4294901760
      %v2342 = vsub.f32 %v244, %v2341
      %2343 = vmatpush1.msra.mxu0 %v2342
      %v2344 = vand.u32 %v247, 4294901760
      %v2345 = vsub.f32 %v247, %v2344
      %2346 = vmatprep.subr.mxu0 %v2345
      %v2347 = vand.u32 %v246, 4294901760
      %v2348 = vsub.f32 %v246, %v2347
      %2349 = vmatpush1.msra.mxu0 %v2348
      %v2350 = vand.u32 %v1617, 4294901760
      %v2351 = vsub.f32 %v1617, %v2350
      %2352 = vmatprep.mubr.f32.mxu0 %v2351
      %v2353 = vand.u32 %v1616, 4294901760
      %v2354 = vsub.f32 %v1616, %v2353
      %2355 = vmatmul.mubr.f32.gmra.mrb[0].mxu0 %v2354
      %v2356 = vpop.f32.mrb[0].mxu0
      %v2357 = vadd.f32 %v2154, %v2356
      %v2358 = vpop.f32.mrb[0].mxu0
      %v2359 = vadd.f32 %v2156, %v2358
      %2360 = vdwg.mxu0
      %v2361 = vand.u32 %v185, 4294901760
      %2362 = vmatprep.subr.mxu0 %v2361
      %v2363 = vand.u32 %v184, 4294901760
      %2364 = vmatpush1.msra.mxu0 %v2363
      %v2365 = vand.u32 %v187, 4294901760
      %2366 = vmatprep.subr.mxu0 %v2365
      %v2367 = vand.u32 %v186, 4294901760
      %2368 = vmatpush1.msra.mxu0 %v2367
      %v2369 = vand.u32 %v189, 4294901760
      %2370 = vmatprep.subr.mxu0 %v2369
      %v2371 = vand.u32 %v188, 4294901760
      %2372 = vmatpush1.msra.mxu0 %v2371
      %v2373 = vand.u32 %v191, 4294901760
      %2374 = vmatprep.subr.mxu0 %v2373
      %v2375 = vand.u32 %v190, 4294901760
      %2376 = vmatpush1.msra.mxu0 %v2375
      %v2377 = vand.u32 %v193, 4294901760
      %2378 = vmatprep.subr.mxu0 %v2377
      %v2379 = vand.u32 %v192, 4294901760
      %2380 = vmatpush1.msra.mxu0 %v2379
      %v2381 = vand.u32 %v195, 4294901760
      %2382 = vmatprep.subr.mxu0 %v2381
      %v2383 = vand.u32 %v194, 4294901760
      %2384 = vmatpush1.msra.mxu0 %v2383
      %v2385 = vand.u32 %v197, 4294901760
      %2386 = vmatprep.subr.mxu0 %v2385
      %v2387 = vand.u32 %v196, 4294901760
      %2388 = vmatpush1.msra.mxu0 %v2387
      %v2389 = vand.u32 %v199, 4294901760
      %2390 = vmatprep.subr.mxu0 %v2389
      %v2391 = vand.u32 %v198, 4294901760
      %2392 = vmatpush1.msra.mxu0 %v2391
      %v2393 = vand.u32 %v201, 4294901760
      %2394 = vmatprep.subr.mxu0 %v2393
      %v2395 = vand.u32 %v200, 4294901760
      %2396 = vmatpush1.msra.mxu0 %v2395
      %v2397 = vand.u32 %v203, 4294901760
      %2398 = vmatprep.subr.mxu0 %v2397
      %v2399 = vand.u32 %v202, 4294901760
      %2400 = vmatpush1.msra.mxu0 %v2399
      %v2401 = vand.u32 %v205, 4294901760
      %2402 = vmatprep.subr.mxu0 %v2401
      %v2403 = vand.u32 %v204, 4294901760
      %2404 = vmatpush1.msra.mxu0 %v2403
      %v2405 = vand.u32 %v207, 4294901760
      %2406 = vmatprep.subr.mxu0 %v2405
      %v2407 = vand.u32 %v206, 4294901760
      %2408 = vmatpush1.msra.mxu0 %v2407
      %v2409 = vand.u32 %v209, 4294901760
      %2410 = vmatprep.subr.mxu0 %v2409
      %v2411 = vand.u32 %v208, 4294901760
      %2412 = vmatpush1.msra.mxu0 %v2411
      %v2413 = vand.u32 %v211, 4294901760
      %2414 = vmatprep.subr.mxu0 %v2413
      %v2415 = vand.u32 %v210, 4294901760
      %2416 = vmatpush1.msra.mxu0 %v2415
      %v2417 = vand.u32 %v213, 4294901760
      %2418 = vmatprep.subr.mxu0 %v2417
      %v2419 = vand.u32 %v212, 4294901760
      %2420 = vmatpush1.msra.mxu0 %v2419
      %v2421 = vand.u32 %v215, 4294901760
      %2422 = vmatprep.subr.mxu0 %v2421
      %v2423 = vand.u32 %v214, 4294901760
      %2424 = vmatpush1.msra.mxu0 %v2423
      %v2425 = vand.u32 %v217, 4294901760
      %2426 = vmatprep.subr.mxu0 %v2425
      %v2427 = vand.u32 %v216, 4294901760
      %2428 = vmatpush1.msra.mxu0 %v2427
      %v2429 = vand.u32 %v219, 4294901760
      %2430 = vmatprep.subr.mxu0 %v2429
      %v2431 = vand.u32 %v218, 4294901760
      %2432 = vmatpush1.msra.mxu0 %v2431
      %v2433 = vand.u32 %v221, 4294901760
      %2434 = vmatprep.subr.mxu0 %v2433
      %v2435 = vand.u32 %v220, 4294901760
      %2436 = vmatpush1.msra.mxu0 %v2435
      %v2437 = vand.u32 %v223, 4294901760
      %2438 = vmatprep.subr.mxu0 %v2437
      %v2439 = vand.u32 %v222, 4294901760
      %2440 = vmatpush1.msra.mxu0 %v2439
      %v2441 = vand.u32 %v225, 4294901760
      %2442 = vmatprep.subr.mxu0 %v2441
      %v2443 = vand.u32 %v224, 4294901760
      %2444 = vmatpush1.msra.mxu0 %v2443
      %v2445 = vand.u32 %v227, 4294901760
      %2446 = vmatprep.subr.mxu0 %v2445
      %v2447 = vand.u32 %v226, 4294901760
      %2448 = vmatpush1.msra.mxu0 %v2447
      %v2449 = vand.u32 %v229, 4294901760
      %2450 = vmatprep.subr.mxu0 %v2449
      %v2451 = vand.u32 %v228, 4294901760
      %2452 = vmatpush1.msra.mxu0 %v2451
      %v2453 = vand.u32 %v231, 4294901760
      %2454 = vmatprep.subr.mxu0 %v2453
      %v2455 = vand.u32 %v230, 4294901760
      %2456 = vmatpush1.msra.mxu0 %v2455
      %v2457 = vand.u32 %v233, 4294901760
      %2458 = vmatprep.subr.mxu0 %v2457
      %v2459 = vand.u32 %v232, 4294901760
      %2460 = vmatpush1.msra.mxu0 %v2459
      %v2461 = vand.u32 %v235, 4294901760
      %2462 = vmatprep.subr.mxu0 %v2461
      %v2463 = vand.u32 %v234, 4294901760
      %2464 = vmatpush1.msra.mxu0 %v2463
      %v2465 = vand.u32 %v237, 4294901760
      %2466 = vmatprep.subr.mxu0 %v2465
      %v2467 = vand.u32 %v236, 4294901760
      %2468 = vmatpush1.msra.mxu0 %v2467
      %v2469 = vand.u32 %v239, 4294901760
      %2470 = vmatprep.subr.mxu0 %v2469
      %v2471 = vand.u32 %v238, 4294901760
      %2472 = vmatpush1.msra.mxu0 %v2471
      %v2473 = vand.u32 %v241, 4294901760
      %2474 = vmatprep.subr.mxu0 %v2473
      %v2475 = vand.u32 %v240, 4294901760
      %2476 = vmatpush1.msra.mxu0 %v2475
      %v2477 = vand.u32 %v243, 4294901760
      %2478 = vmatprep.subr.mxu0 %v2477
      %v2479 = vand.u32 %v242, 4294901760
      %2480 = vmatpush1.msra.mxu0 %v2479
      %v2481 = vand.u32 %v245, 4294901760
      %2482 = vmatprep.subr.mxu0 %v2481
      %v2483 = vand.u32 %v244, 4294901760
      %2484 = vmatpush1.msra.mxu0 %v2483
      %v2485 = vand.u32 %v247, 4294901760
      %2486 = vmatprep.subr.mxu0 %v2485
      %v2487 = vand.u32 %v246, 4294901760
      %2488 = vmatpush1.msra.mxu0 %v2487
      %v2489 = vand.u32 %v1617, 4294901760
      %v2490 = vsub.f32 %v1617, %v2489
      %v2491 = vand.u32 %v2490, 4294901760
      %2492 = vmatprep.mubr.f32.mxu0 %v2491
      %v2493 = vand.u32 %v1616, 4294901760
      %v2494 = vsub.f32 %v1616, %v2493
      %v2495 = vand.u32 %v2494, 4294901760
      %2496 = vmatmul.mubr.f32.gmra.mrb[0].mxu0 %v2495
      %v2497 = vpop.f32.mrb[0].mxu0
      %v2498 = vadd.f32 %v2357, %v2497
      %v2499 = vpop.f32.mrb[0].mxu0
      %v2500 = vadd.f32 %v2359, %v2499
      %2501 = vdwg.mxu0
      %v2502 = vand.u32 %v185, 4294901760
      %v2503 = vsub.f32 %v185, %v2502
      %v2504 = vand.u32 %v2503, 4294901760
      %2505 = vmatprep.subr.mxu0 %v2504
      %v2506 = vand.u32 %v184, 4294901760
      %v2507 = vsub.f32 %v184, %v2506
      %v2508 = vand.u32 %v2507, 4294901760
      %2509 = vmatpush1.msra.mxu0 %v2508
      %v2510 = vand.u32 %v187, 4294901760
      %v2511 = vsub.f32 %v187, %v2510
      %v2512 = vand.u32 %v2511, 4294901760
      %2513 = vmatprep.subr.mxu0 %v2512
      %v2514 = vand.u32 %v186, 4294901760
      %v2515 = vsub.f32 %v186, %v2514
      %v2516 = vand.u32 %v2515, 4294901760
      %2517 = vmatpush1.msra.mxu0 %v2516
      %v2518 = vand.u32 %v189, 4294901760
      %v2519 = vsub.f32 %v189, %v2518
      %v2520 = vand.u32 %v2519, 4294901760
      %2521 = vmatprep.subr.mxu0 %v2520
      %v2522 = vand.u32 %v188, 4294901760
      %v2523 = vsub.f32 %v188, %v2522
      %v2524 = vand.u32 %v2523, 4294901760
      %2525 = vmatpush1.msra.mxu0 %v2524
      %v2526 = vand.u32 %v191, 4294901760
      %v2527 = vsub.f32 %v191, %v2526
      %v2528 = vand.u32 %v2527, 4294901760
      %2529 = vmatprep.subr.mxu0 %v2528
      %v2530 = vand.u32 %v190, 4294901760
      %v2531 = vsub.f32 %v190, %v2530
      %v2532 = vand.u32 %v2531, 4294901760
      %2533 = vmatpush1.msra.mxu0 %v2532
      %v2534 = vand.u32 %v193, 4294901760
      %v2535 = vsub.f32 %v193, %v2534
      %v2536 = vand.u32 %v2535, 4294901760
      %2537 = vmatprep.subr.mxu0 %v2536
      %v2538 = vand.u32 %v192, 4294901760
      %v2539 = vsub.f32 %v192, %v2538
      %v2540 = vand.u32 %v2539, 4294901760
      %2541 = vmatpush1.msra.mxu0 %v2540
      %v2542 = vand.u32 %v195, 4294901760
      %v2543 = vsub.f32 %v195, %v2542
      %v2544 = vand.u32 %v2543, 4294901760
      %2545 = vmatprep.subr.mxu0 %v2544
      %v2546 = vand.u32 %v194, 4294901760
      %v2547 = vsub.f32 %v194, %v2546
      %v2548 = vand.u32 %v2547, 4294901760
      %2549 = vmatpush1.msra.mxu0 %v2548
      %v2550 = vand.u32 %v197, 4294901760
      %v2551 = vsub.f32 %v197, %v2550
      %v2552 = vand.u32 %v2551, 4294901760
      %2553 = vmatprep.subr.mxu0 %v2552
      %v2554 = vand.u32 %v196, 4294901760
      %v2555 = vsub.f32 %v196, %v2554
      %v2556 = vand.u32 %v2555, 4294901760
      %2557 = vmatpush1.msra.mxu0 %v2556
      %v2558 = vand.u32 %v199, 4294901760
      %v2559 = vsub.f32 %v199, %v2558
      %v2560 = vand.u32 %v2559, 4294901760
      %2561 = vmatprep.subr.mxu0 %v2560
      %v2562 = vand.u32 %v198, 4294901760
      %v2563 = vsub.f32 %v198, %v2562
      %v2564 = vand.u32 %v2563, 4294901760
      %2565 = vmatpush1.msra.mxu0 %v2564
      %v2566 = vand.u32 %v201, 4294901760
      %v2567 = vsub.f32 %v201, %v2566
      %v2568 = vand.u32 %v2567, 4294901760
      %2569 = vmatprep.subr.mxu0 %v2568
      %v2570 = vand.u32 %v200, 4294901760
      %v2571 = vsub.f32 %v200, %v2570
      %v2572 = vand.u32 %v2571, 4294901760
      %2573 = vmatpush1.msra.mxu0 %v2572
      %v2574 = vand.u32 %v203, 4294901760
      %v2575 = vsub.f32 %v203, %v2574
      %v2576 = vand.u32 %v2575, 4294901760
      %2577 = vmatprep.subr.mxu0 %v2576
      %v2578 = vand.u32 %v202, 4294901760
      %v2579 = vsub.f32 %v202, %v2578
      %v2580 = vand.u32 %v2579, 4294901760
      %2581 = vmatpush1.msra.mxu0 %v2580
      %v2582 = vand.u32 %v205, 4294901760
      %v2583 = vsub.f32 %v205, %v2582
      %v2584 = vand.u32 %v2583, 4294901760
      %2585 = vmatprep.subr.mxu0 %v2584
      %v2586 = vand.u32 %v204, 4294901760
      %v2587 = vsub.f32 %v204, %v2586
      %v2588 = vand.u32 %v2587, 4294901760
      %2589 = vmatpush1.msra.mxu0 %v2588
      %v2590 = vand.u32 %v207, 4294901760
      %v2591 = vsub.f32 %v207, %v2590
      %v2592 = vand.u32 %v2591, 4294901760
      %2593 = vmatprep.subr.mxu0 %v2592
      %v2594 = vand.u32 %v206, 4294901760
      %v2595 = vsub.f32 %v206, %v2594
      %v2596 = vand.u32 %v2595, 4294901760
      %2597 = vmatpush1.msra.mxu0 %v2596
      %v2598 = vand.u32 %v209, 4294901760
      %v2599 = vsub.f32 %v209, %v2598
      %v2600 = vand.u32 %v2599, 4294901760
      %2601 = vmatprep.subr.mxu0 %v2600
      %v2602 = vand.u32 %v208, 4294901760
      %v2603 = vsub.f32 %v208, %v2602
      %v2604 = vand.u32 %v2603, 4294901760
      %2605 = vmatpush1.msra.mxu0 %v2604
      %v2606 = vand.u32 %v211, 4294901760
      %v2607 = vsub.f32 %v211, %v2606
      %v2608 = vand.u32 %v2607, 4294901760
      %2609 = vmatprep.subr.mxu0 %v2608
      %v2610 = vand.u32 %v210, 4294901760
      %v2611 = vsub.f32 %v210, %v2610
      %v2612 = vand.u32 %v2611, 4294901760
      %2613 = vmatpush1.msra.mxu0 %v2612
      %v2614 = vand.u32 %v213, 4294901760
      %v2615 = vsub.f32 %v213, %v2614
      %v2616 = vand.u32 %v2615, 4294901760
      %2617 = vmatprep.subr.mxu0 %v2616
      %v2618 = vand.u32 %v212, 4294901760
      %v2619 = vsub.f32 %v212, %v2618
      %v2620 = vand.u32 %v2619, 4294901760
      %2621 = vmatpush1.msra.mxu0 %v2620
      %v2622 = vand.u32 %v215, 4294901760
      %v2623 = vsub.f32 %v215, %v2622
      %v2624 = vand.u32 %v2623, 4294901760
      %2625 = vmatprep.subr.mxu0 %v2624
      %v2626 = vand.u32 %v214, 4294901760
      %v2627 = vsub.f32 %v214, %v2626
      %v2628 = vand.u32 %v2627, 4294901760
      %2629 = vmatpush1.msra.mxu0 %v2628
      %v2630 = vand.u32 %v217, 4294901760
      %v2631 = vsub.f32 %v217, %v2630
      %v2632 = vand.u32 %v2631, 4294901760
      %2633 = vmatprep.subr.mxu0 %v2632
      %v2634 = vand.u32 %v216, 4294901760
      %v2635 = vsub.f32 %v216, %v2634
      %v2636 = vand.u32 %v2635, 4294901760
      %2637 = vmatpush1.msra.mxu0 %v2636
      %v2638 = vand.u32 %v219, 4294901760
      %v2639 = vsub.f32 %v219, %v2638
      %v2640 = vand.u32 %v2639, 4294901760
      %2641 = vmatprep.subr.mxu0 %v2640
      %v2642 = vand.u32 %v218, 4294901760
      %v2643 = vsub.f32 %v218, %v2642
      %v2644 = vand.u32 %v2643, 4294901760
      %2645 = vmatpush1.msra.mxu0 %v2644
      %v2646 = vand.u32 %v221, 4294901760
      %v2647 = vsub.f32 %v221, %v2646
      %v2648 = vand.u32 %v2647, 4294901760
      %2649 = vmatprep.subr.mxu0 %v2648
      %v2650 = vand.u32 %v220, 4294901760
      %v2651 = vsub.f32 %v220, %v2650
      %v2652 = vand.u32 %v2651, 4294901760
      %2653 = vmatpush1.msra.mxu0 %v2652
      %v2654 = vand.u32 %v223, 4294901760
      %v2655 = vsub.f32 %v223, %v2654
      %v2656 = vand.u32 %v2655, 4294901760
      %2657 = vmatprep.subr.mxu0 %v2656
      %v2658 = vand.u32 %v222, 4294901760
      %v2659 = vsub.f32 %v222, %v2658
      %v2660 = vand.u32 %v2659, 4294901760
      %2661 = vmatpush1.msra.mxu0 %v2660
      %v2662 = vand.u32 %v225, 4294901760
      %v2663 = vsub.f32 %v225, %v2662
      %v2664 = vand.u32 %v2663, 4294901760
      %2665 = vmatprep.subr.mxu0 %v2664
      %v2666 = vand.u32 %v224, 4294901760
      %v2667 = vsub.f32 %v224, %v2666
      %v2668 = vand.u32 %v2667, 4294901760
      %2669 = vmatpush1.msra.mxu0 %v2668
      %v2670 = vand.u32 %v227, 4294901760
      %v2671 = vsub.f32 %v227, %v2670
      %v2672 = vand.u32 %v2671, 4294901760
      %2673 = vmatprep.subr.mxu0 %v2672
      %v2674 = vand.u32 %v226, 4294901760
      %v2675 = vsub.f32 %v226, %v2674
      %v2676 = vand.u32 %v2675, 4294901760
      %2677 = vmatpush1.msra.mxu0 %v2676
      %v2678 = vand.u32 %v229, 4294901760
      %v2679 = vsub.f32 %v229, %v2678
      %v2680 = vand.u32 %v2679, 4294901760
      %2681 = vmatprep.subr.mxu0 %v2680
      %v2682 = vand.u32 %v228, 4294901760
      %v2683 = vsub.f32 %v228, %v2682
      %v2684 = vand.u32 %v2683, 4294901760
      %2685 = vmatpush1.msra.mxu0 %v2684
      %v2686 = vand.u32 %v231, 4294901760
      %v2687 = vsub.f32 %v231, %v2686
      %v2688 = vand.u32 %v2687, 4294901760
      %2689 = vmatprep.subr.mxu0 %v2688
      %v2690 = vand.u32 %v230, 4294901760
      %v2691 = vsub.f32 %v230, %v2690
      %v2692 = vand.u32 %v2691, 4294901760
      %2693 = vmatpush1.msra.mxu0 %v2692
      %v2694 = vand.u32 %v233, 4294901760
      %v2695 = vsub.f32 %v233, %v2694
      %v2696 = vand.u32 %v2695, 4294901760
      %2697 = vmatprep.subr.mxu0 %v2696
      %v2698 = vand.u32 %v232, 4294901760
      %v2699 = vsub.f32 %v232, %v2698
      %v2700 = vand.u32 %v2699, 4294901760
      %2701 = vmatpush1.msra.mxu0 %v2700
      %v2702 = vand.u32 %v235, 4294901760
      %v2703 = vsub.f32 %v235, %v2702
      %v2704 = vand.u32 %v2703, 4294901760
      %2705 = vmatprep.subr.mxu0 %v2704
      %v2706 = vand.u32 %v234, 4294901760
      %v2707 = vsub.f32 %v234, %v2706
      %v2708 = vand.u32 %v2707, 4294901760
      %2709 = vmatpush1.msra.mxu0 %v2708
      %v2710 = vand.u32 %v237, 4294901760
      %v2711 = vsub.f32 %v237, %v2710
      %v2712 = vand.u32 %v2711, 4294901760
      %2713 = vmatprep.subr.mxu0 %v2712
      %v2714 = vand.u32 %v236, 4294901760
      %v2715 = vsub.f32 %v236, %v2714
      %v2716 = vand.u32 %v2715, 4294901760
      %2717 = vmatpush1.msra.mxu0 %v2716
      %v2718 = vand.u32 %v239, 4294901760
      %v2719 = vsub.f32 %v239, %v2718
      %v2720 = vand.u32 %v2719, 4294901760
      %2721 = vmatprep.subr.mxu0 %v2720
      %v2722 = vand.u32 %v238, 4294901760
      %v2723 = vsub.f32 %v238, %v2722
      %v2724 = vand.u32 %v2723, 4294901760
      %2725 = vmatpush1.msra.mxu0 %v2724
      %v2726 = vand.u32 %v241, 4294901760
      %v2727 = vsub.f32 %v241, %v2726
      %v2728 = vand.u32 %v2727, 4294901760
      %2729 = vmatprep.subr.mxu0 %v2728
      %v2730 = vand.u32 %v240, 4294901760
      %v2731 = vsub.f32 %v240, %v2730
      %v2732 = vand.u32 %v2731, 4294901760
      %2733 = vmatpush1.msra.mxu0 %v2732
      %v2734 = vand.u32 %v243, 4294901760
      %v2735 = vsub.f32 %v243, %v2734
      %v2736 = vand.u32 %v2735, 4294901760
      %2737 = vmatprep.subr.mxu0 %v2736
      %v2738 = vand.u32 %v242, 4294901760
      %v2739 = vsub.f32 %v242, %v2738
      %v2740 = vand.u32 %v2739, 4294901760
      %2741 = vmatpush1.msra.mxu0 %v2740
      %v2742 = vand.u32 %v245, 4294901760
      %v2743 = vsub.f32 %v245, %v2742
      %v2744 = vand.u32 %v2743, 4294901760
      %2745 = vmatprep.subr.mxu0 %v2744
      %v2746 = vand.u32 %v244, 4294901760
      %v2747 = vsub.f32 %v244, %v2746
      %v2748 = vand.u32 %v2747, 4294901760
      %2749 = vmatpush1.msra.mxu0 %v2748
      %v2750 = vand.u32 %v247, 4294901760
      %v2751 = vsub.f32 %v247, %v2750
      %v2752 = vand.u32 %v2751, 4294901760
      %2753 = vmatprep.subr.mxu0 %v2752
      %v2754 = vand.u32 %v246, 4294901760
      %v2755 = vsub.f32 %v246, %v2754
      %v2756 = vand.u32 %v2755, 4294901760
      %2757 = vmatpush1.msra.mxu0 %v2756
      %v2758 = vand.u32 %v1617, 4294901760
      %2759 = vmatprep.mubr.f32.mxu0 %v2758
      %v2760 = vand.u32 %v1616, 4294901760
      %2761 = vmatmul.mubr.f32.gmra.mrb[0].mxu0 %v2760
      %v2762 = vpop.f32.mrb[0].mxu0
      %v2763 = vadd.f32 %v2498, %v2762
      %v2764 = vpop.f32.mrb[0].mxu0
      %v2765 = vadd.f32 %v2500, %v2764
      %2766 = vdwg.mxu0
      %v2767 = vand.u32 %v185, 4294901760
      %2768 = vmatprep.subr.mxu0 %v2767
      %v2769 = vand.u32 %v184, 4294901760
      %2770 = vmatpush1.msra.mxu0 %v2769
      %v2771 = vand.u32 %v187, 4294901760
      %2772 = vmatprep.subr.mxu0 %v2771
      %v2773 = vand.u32 %v186, 4294901760
      %2774 = vmatpush1.msra.mxu0 %v2773
      %v2775 = vand.u32 %v189, 4294901760
      %2776 = vmatprep.subr.mxu0 %v2775
      %v2777 = vand.u32 %v188, 4294901760
      %2778 = vmatpush1.msra.mxu0 %v2777
      %v2779 = vand.u32 %v191, 4294901760
      %2780 = vmatprep.subr.mxu0 %v2779
      %v2781 = vand.u32 %v190, 4294901760
      %2782 = vmatpush1.msra.mxu0 %v2781
      %v2783 = vand.u32 %v193, 4294901760
      %2784 = vmatprep.subr.mxu0 %v2783
      %v2785 = vand.u32 %v192, 4294901760
      %2786 = vmatpush1.msra.mxu0 %v2785
      %v2787 = vand.u32 %v195, 4294901760
      %2788 = vmatprep.subr.mxu0 %v2787
      %v2789 = vand.u32 %v194, 4294901760
      %2790 = vmatpush1.msra.mxu0 %v2789
      %v2791 = vand.u32 %v197, 4294901760
      %2792 = vmatprep.subr.mxu0 %v2791
      %v2793 = vand.u32 %v196, 4294901760
      %2794 = vmatpush1.msra.mxu0 %v2793
      %v2795 = vand.u32 %v199, 4294901760
      %2796 = vmatprep.subr.mxu0 %v2795
      %v2797 = vand.u32 %v198, 4294901760
      %2798 = vmatpush1.msra.mxu0 %v2797
      %v2799 = vand.u32 %v201, 4294901760
      %2800 = vmatprep.subr.mxu0 %v2799
      %v2801 = vand.u32 %v200, 4294901760
      %2802 = vmatpush1.msra.mxu0 %v2801
      %v2803 = vand.u32 %v203, 4294901760
      %2804 = vmatprep.subr.mxu0 %v2803
      %v2805 = vand.u32 %v202, 4294901760
      %2806 = vmatpush1.msra.mxu0 %v2805
      %v2807 = vand.u32 %v205, 4294901760
      %2808 = vmatprep.subr.mxu0 %v2807
      %v2809 = vand.u32 %v204, 4294901760
      %2810 = vmatpush1.msra.mxu0 %v2809
      %v2811 = vand.u32 %v207, 4294901760
      %2812 = vmatprep.subr.mxu0 %v2811
      %v2813 = vand.u32 %v206, 4294901760
      %2814 = vmatpush1.msra.mxu0 %v2813
      %v2815 = vand.u32 %v209, 4294901760
      %2816 = vmatprep.subr.mxu0 %v2815
      %v2817 = vand.u32 %v208, 4294901760
      %2818 = vmatpush1.msra.mxu0 %v2817
      %v2819 = vand.u32 %v211, 4294901760
      %2820 = vmatprep.subr.mxu0 %v2819
      %v2821 = vand.u32 %v210, 4294901760
      %2822 = vmatpush1.msra.mxu0 %v2821
      %v2823 = vand.u32 %v213, 4294901760
      %2824 = vmatprep.subr.mxu0 %v2823
      %v2825 = vand.u32 %v212, 4294901760
      %2826 = vmatpush1.msra.mxu0 %v2825
      %v2827 = vand.u32 %v215, 4294901760
      %2828 = vmatprep.subr.mxu0 %v2827
      %v2829 = vand.u32 %v214, 4294901760
      %2830 = vmatpush1.msra.mxu0 %v2829
      %v2831 = vand.u32 %v217, 4294901760
      %2832 = vmatprep.subr.mxu0 %v2831
      %v2833 = vand.u32 %v216, 4294901760
      %2834 = vmatpush1.msra.mxu0 %v2833
      %v2835 = vand.u32 %v219, 4294901760
      %2836 = vmatprep.subr.mxu0 %v2835
      %v2837 = vand.u32 %v218, 4294901760
      %2838 = vmatpush1.msra.mxu0 %v2837
      %v2839 = vand.u32 %v221, 4294901760
      %2840 = vmatprep.subr.mxu0 %v2839
      %v2841 = vand.u32 %v220, 4294901760
      %2842 = vmatpush1.msra.mxu0 %v2841
      %v2843 = vand.u32 %v223, 4294901760
      %2844 = vmatprep.subr.mxu0 %v2843
      %v2845 = vand.u32 %v222, 4294901760
      %2846 = vmatpush1.msra.mxu0 %v2845
      %v2847 = vand.u32 %v225, 4294901760
      %2848 = vmatprep.subr.mxu0 %v2847
      %v2849 = vand.u32 %v224, 4294901760
      %2850 = vmatpush1.msra.mxu0 %v2849
      %v2851 = vand.u32 %v227, 4294901760
      %2852 = vmatprep.subr.mxu0 %v2851
      %v2853 = vand.u32 %v226, 4294901760
      %2854 = vmatpush1.msra.mxu0 %v2853
      %v2855 = vand.u32 %v229, 4294901760
      %2856 = vmatprep.subr.mxu0 %v2855
      %v2857 = vand.u32 %v228, 4294901760
      %2858 = vmatpush1.msra.mxu0 %v2857
      %v2859 = vand.u32 %v231, 4294901760
      %2860 = vmatprep.subr.mxu0 %v2859
      %v2861 = vand.u32 %v230, 4294901760
      %2862 = vmatpush1.msra.mxu0 %v2861
      %v2863 = vand.u32 %v233, 4294901760
      %2864 = vmatprep.subr.mxu0 %v2863
      %v2865 = vand.u32 %v232, 4294901760
      %2866 = vmatpush1.msra.mxu0 %v2865
      %v2867 = vand.u32 %v235, 4294901760
      %2868 = vmatprep.subr.mxu0 %v2867
      %v2869 = vand.u32 %v234, 4294901760
      %2870 = vmatpush1.msra.mxu0 %v2869
      %v2871 = vand.u32 %v237, 4294901760
      %2872 = vmatprep.subr.mxu0 %v2871
      %v2873 = vand.u32 %v236, 4294901760
      %2874 = vmatpush1.msra.mxu0 %v2873
      %v2875 = vand.u32 %v239, 4294901760
      %2876 = vmatprep.subr.mxu0 %v2875
      %v2877 = vand.u32 %v238, 4294901760
      %2878 = vmatpush1.msra.mxu0 %v2877
      %v2879 = vand.u32 %v241, 4294901760
      %2880 = vmatprep.subr.mxu0 %v2879
      %v2881 = vand.u32 %v240, 4294901760
      %2882 = vmatpush1.msra.mxu0 %v2881
      %v2883 = vand.u32 %v243, 4294901760
      %2884 = vmatprep.subr.mxu0 %v2883
      %v2885 = vand.u32 %v242, 4294901760
      %2886 = vmatpush1.msra.mxu0 %v2885
      %v2887 = vand.u32 %v245, 4294901760
      %2888 = vmatprep.subr.mxu0 %v2887
      %v2889 = vand.u32 %v244, 4294901760
      %2890 = vmatpush1.msra.mxu0 %v2889
      %v2891 = vand.u32 %v247, 4294901760
      %2892 = vmatprep.subr.mxu0 %v2891
      %v2893 = vand.u32 %v246, 4294901760
      %2894 = vmatpush1.msra.mxu0 %v2893
      %v2895 = vand.u32 %v1617, 4294901760
      %2896 = vmatprep.mubr.f32.mxu0 %v2895
      %v2897 = vand.u32 %v1616, 4294901760
      %2898 = vmatmul.mubr.f32.gmra.mrb[0].mxu0 %v2897
      %v2899 = vpop.f32.mrb[0].mxu0
      %v2900 = vadd.f32 %v2763, %v2899
      %v2901 = vpop.f32.mrb[0].mxu0
      %v2902 = vadd.f32 %v2765, %v2901
      %2903 = vdwg.mxu0
      %v2904 = vxor.u32 %v2900, 2147483648
      %v2905 = vxor.u32 %v2902, 2147483648
      %v2906 = vmul.f32 %v2904, 1.442695
      %v2907 = vpow.pop %v2906
      %v2908 = vmul.f32 %v2905, 1.442695
      %v2909 = vpow.pop %v2908
      %v2910 = vadd.f32 %v2907, 1.0
      %v2911 = vadd.f32 %v2909, 1.0
      %v2912 = vrcp.pop %v2910
      %v2913 = vmul.f32 1.0, %v2912
      %v2914 = vrcp.pop %v2911
      %v2915 = vmul.f32 1.0, %v2914
      %v2918 = vcombine.low %v2913, %v2915
      %v2920 = vunpack.c.l.s4 1966171168
      %v2921 = vunpack.c.0.s8 %v2920
      %v2922 = vlaneseq
      %v2923 = vshrl.u32 %v2922, 7
      %v2924 = vsub.s32 %v2921, %v2923
      %v2925 = vrot.slane %v2918, %v2924
      %v2926 = vcombine.high %v2925, %v2925
      %v2928 = vunpack.c.l.s4 1966171168
      %v2929 = vunpack.c.0.s8 %v2928
      %v2930 = vlaneseq
      %v2931 = vshrl.u32 %v2930, 7
      %v2932 = vsub.s32 %v2929, %v2931
      %v2933 = vrot.slane %v2925, %v2932
      %v2935 = vunpack.c.l.s4 1966171168
      %v2936 = vunpack.c.0.s8 %v2935
      %v2937 = vlaneseq
      %v2938 = vshrl.u32 %v2937, 7
      %v2939 = vsub.s32 %v2936, %v2938
      %v2940 = vrot.slane %v2926, %v2939
      %v2943 = vlaneseq
      %vm2944 = vcmp.ge.s32.totalorder %v2943, 0
      %vm2945 = vcmp.lt.s32.totalorder %v2943, 256
      %vm2946 = vmand %vm2944, %vm2945
      %2947 = vst.msk [vmem:[#allocation9] sm:$0x3] %vm2946, %v2933
      %2948 = vst.msk [vmem:[#allocation9 + $0x2] sm:$0x3] %vm2946, %v2940
    $region25: #{tpu_custom_call.1} parent=1 // pred_fallthru
      _
    // Predicated region
    $region26: #{tpu_custom_call.1} parent=1 // pred_check
      _
    $region27: #{tpu_custom_call.1} parent=1 // pred_check_branch
      %2950 = sbr.rel (0) target = $region29
    $region28: #{tpu_custom_call.1} parent=1 // pred_region
      %s2952 = ssub.s32 64, 64
      %2953 = vsyncadd [#allocation6], %s2952
      %s2954 = sshll.u32 [#allocation9], 4
      %s2955 = int_to_ptr.vmem [resolvable:$true] %s2954
      %2960 = dma.vmem_to_hbm [thread:$0]  %s2955, 64, %s2, [#allocation6], 32, 32, 2
    $region29: #{tpu_custom_call.1} parent=1 // pred_fallthru
      _
    // Predicated region
    $region30: #{tpu_custom_call.1} parent=1 // pred_check
      _
    $region31: #{tpu_custom_call.1} parent=1 // pred_check_branch
      %2962 = sbr.rel (0) target = $region33
    $region32: #{tpu_custom_call.1} parent=1 // pred_region
      %2963 = dma.done [#allocation6], 64
    $region33: #{tpu_custom_call.1} parent=1 // pred_fallthru
      _
    %2964 = vsyncpa [#allocation5], 1
    %2965 = vsyncpa [#allocation8], 1
    %2966 = vsyncpa [#allocation6], 1

</llo_original>
